<compile_context>
chip_gen: v6e
topology: v6e:2x2x1
jax: 0.10.0
libtpu: 0.0.40
codegen_flags: <defaults>
</compile_context>

<pallas_src>
import functools

import numpy as np
import jax
import jax.numpy as jnp
from jax.experimental import pallas as pl
from jax.experimental.pallas import tpu as pltpu


# ----------------------------------------------------------------------------
# The single fused Pallas kernel (one batch tile of tn rows per grid step).
# ----------------------------------------------------------------------------
def _dqn_fused_kernel(p_ref, w1_ref, b1_ref, w2_ref, b2_ref,
                      wf1_ref, bf1_ref, wf2_ref, bf2_ref, o_ref,
                      a1_ref, x2_ref, h2_ref, x3_ref,
                      *, tn, c1, oc2, ow1, s2, kh2, kw2, oh2, ow2):
    # ---- conv1 + ReLU: one K = C*KH1*KW1 matmul over all conv1 positions of
    # this batch tile (rows ordered (pos1, n)). ----
    a1_ref[...] = jnp.maximum(
        jnp.dot(p_ref[...], w1_ref[...], preferred_element_type=jnp.float32)
        + b1_ref[...], 0.0)

    # ---- assemble the conv2 im2col matrix in VMEM: rows (k2, n), columns
    # (q = kernel offset, c1).  Every copy is a sublane-aligned (tn, c1) block
    # at static offsets. ----
    for q in range(kh2 * kw2):
        i2, j2 = q // kw2, q % kw2
        for k in range(oh2 * ow2):
            r2, cc2 = k // ow2, k % ow2
            pos1 = (r2 * s2 + i2) * ow1 + (cc2 * s2 + j2)
            x2_ref[k * tn:(k + 1) * tn, q * c1:(q + 1) * c1] = (
                a1_ref[pos1 * tn:(pos1 + 1) * tn, :])

    # ---- conv2 + ReLU: one K = kh2*kw2*c1 matmul (full MXU depth). ----
    h2_ref[...] = jnp.maximum(
        jnp.dot(x2_ref[...], w2_ref[...], preferred_element_type=jnp.float32)
        + b2_ref[...], 0.0)

    # ---- flatten: row blocks -> column slabs (matches the host-permuted
    # wf1; no transpose / reshape). ----
    for k in range(oh2 * ow2):
        x3_ref[:, k * oc2:(k + 1) * oc2] = h2_ref[k * tn:(k + 1) * tn, :]

    # ---- fc1 + ReLU: one K = n_pos2*oc2 matmul. ----
    h3 = jnp.maximum(
        jnp.dot(x3_ref[...], wf1_ref[...], preferred_element_type=jnp.float32)
        + bf1_ref[...], 0.0)

    # ---- fc2 into the lane-dense (128-padded) output slab. ----
    o_ref[...] = (jnp.dot(h3, wf2_ref[...], preferred_element_type=jnp.float32)
                  + bf2_ref[...]).astype(o_ref.dtype)


# ----------------------------------------------------------------------------
# Host-side glue (pure layout plumbing, no FLOPs)
# ----------------------------------------------------------------------------
def _conv_out(size, k, stride):
    return (size - k) // stride + 1


def _round_up(x, m):
    return ((x + m - 1) // m) * m


def _padded_bytes(shape, itemsize=4):
    """f32 VMEM footprint of a 2-D array after (8, 128) tile padding."""
    rows = int(np.prod(shape[:-1])) if len(shape) > 1 else 1
    return _round_up(max(rows, 1), 8) * _round_up(int(shape[-1]), 128) * itemsize


def _im2col(x_nchw, kh, kw, stride):
    """Strided-slice patch extraction (no gather):
       (N,C,H,W) -> (N, OH, OW, C*kh*kw), feature cols ordered (c, kh, kw)."""
    N, C, H, W = x_nchw.shape
    OH = _conv_out(H, kh, stride)
    OW = _conv_out(W, kw, stride)
    cols = []
    for i in range(kh):
        for j in range(kw):
            cols.append(
                x_nchw[:, :, i:i + stride * OH:stride, j:j + stride * OW:stride])
    p = jnp.stack(cols, axis=0).reshape(kh, kw, N, C, OH, OW)
    p = p.transpose(2, 4, 5, 3, 0, 1)                 # (N, OH, OW, C, KH, KW)
    return p.reshape(N, OH, OW, C * kh * kw)


def prepare_params(params, input_shape, stride1=4, stride2=2):
    """One-time host-side weight re-layout (PyTorch layouts -> kernel layouts)."""
    _, H, W = input_shape
    oc1, _, kh1, kw1 = params["w_conv1"].shape
    oc2, cin2, kh2, kw2 = params["w_conv2"].shape
    oh1, ow1 = _conv_out(H, kh1, stride1), _conv_out(W, kw1, stride1)
    oh2, ow2 = _conv_out(oh1, kh2, stride2), _conv_out(ow1, kw2, stride2)
    n_pos2 = oh2 * ow2
    na = params["w_fc2"].shape[1]
    na_pad = max(128, _round_up(na, 128))

    # fc1 rows: PyTorch flatten order (oc2, oh2, ow2) -> kernel order (pos2, oc2)
    wf1 = params["w_fc1"].reshape(oc2, n_pos2, -1)
    wf1 = wf1.transpose(1, 0, 2).reshape(n_pos2 * oc2, -1)

    weights = dict(
        w1m=params["w_conv1"].reshape(oc1, -1).T,                 # (C*KH1*KW1, OC1)
        b1=params["b_conv1"].reshape(1, oc1),
        # conv2 weight rows ordered (i2, j2, cin) to match X2's column slabs
        w2m=params["w_conv2"].transpose(2, 3, 1, 0).reshape(kh2 * kw2 * cin2, oc2),
        b2=params["b_conv2"].reshape(1, oc2),
        wf1=wf1,
        bf1=params["b_fc1"].reshape(1, -1),
        wf2=jnp.pad(params["w_fc2"], ((0, 0), (0, na_pad - na))),  # lane-dense
        bf2=jnp.pad(params["b_fc2"], (0, na_pad - na)).reshape(1, na_pad),
    )
    geom = dict(kh1=kh1, kw1=kw1, s1=stride1, kh2=kh2, kw2=kw2, s2=stride2,
                oh1=oh1, ow1=ow1, oh2=oh2, ow2=ow2, c1=oc1, oc2=oc2,
                na=na, na_pad=na_pad)
    return weights, geom


def make_forward(geom, tile_batch=None):
    g = dict(geom)

    @jax.jit
    def forward(x_nchw, w):
        n, C = x_nchw.shape[0], x_nchw.shape[1]
        f1 = C * g["kh1"] * g["kw1"]
        n_pos1 = g["oh1"] * g["ow1"]
        n_pos2 = g["oh2"] * g["ow2"]
        q2 = g["kh2"] * g["kw2"]
        c1, oc2, na_pad = g["c1"], g["oc2"], g["na_pad"]

        # Batch tile: multiple of 8 sublanes; 128-row tiles for training-size
        # batches, the (padded) batch itself for small ones.
        tn = _round_up(tile_batch if tile_batch else min(128, n), 8)
        n_pad = _round_up(n, tn)
        n_tiles = n_pad // tn

        # conv1 im2col via strided slices (no gather, no duplication), laid
        # out so each batch tile is one contiguous (pos1-major, batch-
        # innermost) row block.
        xp = jnp.pad(x_nchw, ((0, n_pad - n), (0, 0), (0, 0), (0, 0)))
        p4 = _im2col(xp, g["kh1"], g["kw1"], g["s1"])     # (n_pad, oh1, ow1, f1)
        p2d = (p4.reshape(n_tiles, tn, n_pos1, f1)
                 .transpose(0, 2, 1, 3)
                 .reshape(n_tiles * n_pos1 * tn, f1))

        args = (p2d, w["w1m"], w["b1"], w["w2m"], w["b2"],
                w["wf1"], w["bf1"], w["wf2"], w["bf2"])

        in_specs = ([pl.BlockSpec((n_pos1 * tn, f1), lambda b: (b, 0))]
                    + [pl.BlockSpec(a.shape, lambda b: (0, 0)) for a in args[1:]])
        out_specs = pl.BlockSpec((tn, na_pad), lambda b: (b, 0))
        scratch_defs = [
            (n_pos1 * tn, c1),          # conv1 activations
            (n_pos2 * tn, q2 * c1),     # conv2 im2col matrix
            (n_pos2 * tn, oc2),         # conv2 activations
            (tn, n_pos2 * oc2),         # flatten (fc1 input)
        ]
        scratch_shapes = [pltpu.VMEM(s, jnp.float32) for s in scratch_defs]

        # Per-tile VMEM budget: double-buffered streamed blocks + resident
        # weights + scratch, all padded to the (8, 128) VMEM tile, plus slack.
        vmem_bytes = (2 * (_padded_bytes((n_pos1 * tn, f1))
                           + _padded_bytes((tn, na_pad)))
                      + 2 * sum(_padded_bytes(a.shape) for a in args[1:])
                      + sum(_padded_bytes(s) for s in scratch_defs)
                      + (4 << 20))
        vmem_bytes = int(min(vmem_bytes, 100 << 20))

        out_pad = pl.pallas_call(
            functools.partial(_dqn_fused_kernel, tn=tn, c1=c1, oc2=oc2,
                              ow1=g["ow1"], s2=g["s2"], kh2=g["kh2"],
                              kw2=g["kw2"], oh2=g["oh2"], ow2=g["ow2"]),
            out_shape=jax.ShapeDtypeStruct((n_pad, na_pad), jnp.float32),
            grid=(n_tiles,),
            in_specs=in_specs,
            out_specs=out_specs,
            scratch_shapes=scratch_shapes,
            compiler_params=pltpu.CompilerParams(
                dimension_semantics=("parallel",),
                vmem_limit_bytes=vmem_bytes),
        )(*args)
        return out_pad[:n, :g["na"]]

    return forward


# ----------------------------------------------------------------------------
# Deterministic parameter init (shapes follow the PyTorch module __init__)
# ----------------------------------------------------------------------------
def init_params(key, input_shape, num_actions, conv_out_size):
    C = input_shape[0]
    ks = jax.random.split(key, 8)
    scale = 0.05
    return {
        "w_conv1": scale * jax.random.normal(ks[0], (16, C, 8, 8), jnp.float32),
        "b_conv1": scale * jax.random.normal(ks[1], (16,), jnp.float32),
        "w_conv2": scale * jax.random.normal(ks[2], (32, 16, 4, 4), jnp.float32),
        "b_conv2": scale * jax.random.normal(ks[3], (32,), jnp.float32),
        # Linear weights stored already-transposed: (in, out)
        "w_fc1": scale * jax.random.normal(ks[4], (conv_out_size, 256), jnp.float32),
        "b_fc1": scale * jax.random.normal(ks[5], (256,), jnp.float32),
        "w_fc2": scale * jax.random.normal(ks[6], (256, num_actions), jnp.float32),
        "b_fc2": scale * jax.random.normal(ks[7], (num_actions,), jnp.float32),
    }


# ----------------------------------------------------------------------------
# Pure-JAX f32 reference (for correctness check of the Pallas path)
# ----------------------------------------------------------------------------
def dqn_forward_ref(x, params):
    hi = jax.lax.Precision.HIGHEST

    def conv(x, w, b, stride):
        y = jax.lax.conv_general_dilated(
            x, w, window_strides=(stride, stride), padding="VALID",
            dimension_numbers=("NCHW", "OIHW", "NCHW"), precision=hi)
        return jax.nn.relu(y + b[None, :, None, None])

    h = conv(x, params["w_conv1"], params["b_conv1"], 4)
    h = conv(h, params["w_conv2"], params["b_conv2"], 2)
    h = h.reshape(h.shape[0], -1)
    h = jax.nn.relu(jnp.dot(h, params["w_fc1"], precision=hi) + params["b_fc1"])
    return jnp.dot(h, params["w_fc2"], precision=hi) + params["b_fc2"]


if __name__ == "__main__":
    # Small shapes consistent with the module: input_shape=(4, 32, 32), batch=2
    # (spatial 32 keeps both conv output sizes positive: 32 -> 7 -> 2).
    batch = 2
    input_shape = (4, 32, 32)
    num_actions = 6

    oh1 = (input_shape[1] - 8) // 4 + 1          # 7
    oh2 = (oh1 - 4) // 2 + 1                     # 2
    conv_out_size = 32 * oh2 * oh2               # 128

    key = jax.random.PRNGKey(0)
    k_params, k_x = jax.random.split(key)
    params = init_params(k_params, input_shape, num_actions, conv_out_size)
    x = jax.random.normal(k_x, (batch,) + input_shape, jnp.float32)

    weights, geom = prepare_params(params, input_shape)
    forward = make_forward(geom)

    q = jax.block_until_ready(forward(x, weights))
    q_ref = jax.block_until_ready(dqn_forward_ref(x, params))

    assert q.shape == (batch, num_actions)
    max_err = float(jnp.max(jnp.abs(q - q_ref)))
    assert jnp.allclose(q, q_ref, rtol=1e-3, atol=1e-3), max_err

    print("KERNEL_OK")
</pallas_src>

<mosaic_0001>
module attributes {stable_mosaic.version = 11 : i64} {
  func.func @_dqn_fused_kernel(%arg0: i32, %arg1: memref<392x256xf32, #tpu.memory_space<vmem>>, %arg2: memref<256x16xf32, #tpu.memory_space<vmem>>, %arg3: memref<1x16xf32, #tpu.memory_space<vmem>>, %arg4: memref<256x32xf32, #tpu.memory_space<vmem>>, %arg5: memref<1x32xf32, #tpu.memory_space<vmem>>, %arg6: memref<128x256xf32, #tpu.memory_space<vmem>>, %arg7: memref<1x256xf32, #tpu.memory_space<vmem>>, %arg8: memref<256x128xf32, #tpu.memory_space<vmem>>, %arg9: memref<1x128xf32, #tpu.memory_space<vmem>>, %arg10: memref<8x128xf32, #tpu.memory_space<vmem>>, %arg11: memref<392x16xf32, #tpu.memory_space<vmem>>, %arg12: memref<32x256xf32, #tpu.memory_space<vmem>>, %arg13: memref<32x32xf32, #tpu.memory_space<vmem>>, %arg14: memref<8x128xf32, #tpu.memory_space<vmem>>) attributes {dimension_semantics = [#tpu.dimension_semantics<parallel>], iteration_bounds = array<i64: 1>, scalar_prefetch = 0 : i64, scratch_operands = 4 : i64, tpu.core_type = #tpu.core_type<tc>, window_params = [{transform_indices = @transform_0, window_bounds = array<i64: 392, 256>}, {pipeline_mode = #tpu.pipeline_mode<synchronous>, transform_indices = @transform_1, window_bounds = array<i64: 256, 16>}, {pipeline_mode = #tpu.pipeline_mode<synchronous>, transform_indices = @transform_2, window_bounds = array<i64: 1, 16>}, {pipeline_mode = #tpu.pipeline_mode<synchronous>, transform_indices = @transform_3, window_bounds = array<i64: 256, 32>}, {pipeline_mode = #tpu.pipeline_mode<synchronous>, transform_indices = @transform_4, window_bounds = array<i64: 1, 32>}, {pipeline_mode = #tpu.pipeline_mode<synchronous>, transform_indices = @transform_5, window_bounds = array<i64: 128, 256>}, {pipeline_mode = #tpu.pipeline_mode<synchronous>, transform_indices = @transform_6, window_bounds = array<i64: 1, 256>}, {pipeline_mode = #tpu.pipeline_mode<synchronous>, transform_indices = @transform_7, window_bounds = array<i64: 256, 128>}, {pipeline_mode = #tpu.pipeline_mode<synchronous>, transform_indices = @transform_8, window_bounds = array<i64: 1, 128>}, {transform_indices = @transform_9, window_bounds = array<i64: 8, 128>}]} {
    %c0 = arith.constant 0 : index
    %c0_0 = arith.constant 0 : index
    %0 = vector.load %arg1[%c0, %c0_0] : memref<392x256xf32, #tpu.memory_space<vmem>>, vector<392x256xf32>
    %c0_1 = arith.constant 0 : index
    %c0_2 = arith.constant 0 : index
    %1 = vector.load %arg2[%c0_1, %c0_2] : memref<256x16xf32, #tpu.memory_space<vmem>>, vector<256x16xf32>
    %cst = arith.constant dense<0.000000e+00> : vector<392x16xf32>
    %2 = tpu.matmul %0, %1, %cst {dimension_numbers = #tpu.dot_dimension_numbers<[1], [0], [0], [1], [0, 0, 1, 1], [], []>} : vector<392x256xf32>, vector<256x16xf32>, vector<392x16xf32> -> vector<392x16xf32>
    %c0_3 = arith.constant 0 : index
    %c0_4 = arith.constant 0 : index
    %3 = vector.load %arg3[%c0_3, %c0_4] : memref<1x16xf32, #tpu.memory_space<vmem>>, vector<1x16xf32>
    %4 = vector.broadcast %3 : vector<1x16xf32> to vector<392x16xf32>
    %5 = arith.addf %2, %4 : vector<392x16xf32>
    %cst_5 = arith.constant 0.000000e+00 : f32
    %6 = vector.broadcast %cst_5 : f32 to vector<392x16xf32>
    %7 = arith.maximumf %5, %6 : vector<392x16xf32>
    %c0_6 = arith.constant 0 : index
    %c0_7 = arith.constant 0 : index
    %8 = vector.load %arg11[%c0_6, %c0_7] : memref<392x16xf32, #tpu.memory_space<vmem>>, vector<392x16xf32>
    tpu.vector_store %arg11[%c0_6, %c0_7], %7 {strides = array<i32>} : memref<392x16xf32, #tpu.memory_space<vmem>>, vector<392x16xf32>,
    %c0_8 = arith.constant 0 : index
    %c0_9 = arith.constant 0 : index
    %9 = vector.load %arg11[%c0_8, %c0_9] : memref<392x16xf32, #tpu.memory_space<vmem>>, vector<8x16xf32>
    %c0_10 = arith.constant 0 : index
    %c0_11 = arith.constant 0 : index
    %10 = vector.load %arg12[%c0_10, %c0_11] : memref<32x256xf32, #tpu.memory_space<vmem>>, vector<8x16xf32>
    tpu.vector_store %arg12[%c0_10, %c0_11], %9 {strides = array<i32>} : memref<32x256xf32, #tpu.memory_space<vmem>>, vector<8x16xf32>,
    %c16 = arith.constant 16 : index
    %c0_12 = arith.constant 0 : index
    %11 = vector.load %arg11[%c16, %c0_12] : memref<392x16xf32, #tpu.memory_space<vmem>>, vector<8x16xf32>
    %c8 = arith.constant 8 : index
    %c0_13 = arith.constant 0 : index
    %12 = vector.load %arg12[%c8, %c0_13] : memref<32x256xf32, #tpu.memory_space<vmem>>, vector<8x16xf32>
    tpu.vector_store %arg12[%c8, %c0_13], %11 {strides = array<i32>} : memref<32x256xf32, #tpu.memory_space<vmem>>, vector<8x16xf32>,
    %c112 = arith.constant 112 : index
    %c0_14 = arith.constant 0 : index
    %13 = vector.load %arg11[%c112, %c0_14] : memref<392x16xf32, #tpu.memory_space<vmem>>, vector<8x16xf32>
    %c16_15 = arith.constant 16 : index
    %c0_16 = arith.constant 0 : index
    %14 = vector.load %arg12[%c16_15, %c0_16] : memref<32x256xf32, #tpu.memory_space<vmem>>, vector<8x16xf32>
    tpu.vector_store %arg12[%c16_15, %c0_16], %13 {strides = array<i32>} : memref<32x256xf32, #tpu.memory_space<vmem>>, vector<8x16xf32>,
    %c128 = arith.constant 128 : index
    %c0_17 = arith.constant 0 : index
    %15 = vector.load %arg11[%c128, %c0_17] : memref<392x16xf32, #tpu.memory_space<vmem>>, vector<8x16xf32>
    %c24 = arith.constant 24 : index
    %c0_18 = arith.constant 0 : index
    %16 = vector.load %arg12[%c24, %c0_18] : memref<32x256xf32, #tpu.memory_space<vmem>>, vector<8x16xf32>
    tpu.vector_store %arg12[%c24, %c0_18], %15 {strides = array<i32>} : memref<32x256xf32, #tpu.memory_space<vmem>>, vector<8x16xf32>,
    %c8_19 = arith.constant 8 : index
    %c0_20 = arith.constant 0 : index
    %17 = vector.load %arg11[%c8_19, %c0_20] : memref<392x16xf32, #tpu.memory_space<vmem>>, vector<8x16xf32>
    %c0_21 = arith.constant 0 : index
    %c16_22 = arith.constant 16 : index
    %18 = vector.load %arg12[%c0_21, %c16_22] : memref<32x256xf32, #tpu.memory_space<vmem>>, vector<8x16xf32>
    tpu.vector_store %arg12[%c0_21, %c16_22], %17 {strides = array<i32>} : memref<32x256xf32, #tpu.memory_space<vmem>>, vector<8x16xf32>,
    %c24_23 = arith.constant 24 : index
    %c0_24 = arith.constant 0 : index
    %19 = vector.load %arg11[%c24_23, %c0_24] : memref<392x16xf32, #tpu.memory_space<vmem>>, vector<8x16xf32>
    %c8_25 = arith.constant 8 : index
    %c16_26 = arith.constant 16 : index
    %20 = vector.load %arg12[%c8_25, %c16_26] : memref<32x256xf32, #tpu.memory_space<vmem>>, vector<8x16xf32>
    tpu.vector_store %arg12[%c8_25, %c16_26], %19 {strides = array<i32>} : memref<32x256xf32, #tpu.memory_space<vmem>>, vector<8x16xf32>,
    %c120 = arith.constant 120 : index
    %c0_27 = arith.constant 0 : index
    %21 = vector.load %arg11[%c120, %c0_27] : memref<392x16xf32, #tpu.memory_space<vmem>>, vector<8x16xf32>
    %c16_28 = arith.constant 16 : index
    %c16_29 = arith.constant 16 : index
    %22 = vector.load %arg12[%c16_28, %c16_29] : memref<32x256xf32, #tpu.memory_space<vmem>>, vector<8x16xf32>
    tpu.vector_store %arg12[%c16_28, %c16_29], %21 {strides = array<i32>} : memref<32x256xf32, #tpu.memory_space<vmem>>, vector<8x16xf32>,
    %c136 = arith.constant 136 : index
    %c0_30 = arith.constant 0 : index
    %23 = vector.load %arg11[%c136, %c0_30] : memref<392x16xf32, #tpu.memory_space<vmem>>, vector<8x16xf32>
    %c24_31 = arith.constant 24 : index
    %c16_32 = arith.constant 16 : index
    %24 = vector.load %arg12[%c24_31, %c16_32] : memref<32x256xf32, #tpu.memory_space<vmem>>, vector<8x16xf32>
    tpu.vector_store %arg12[%c24_31, %c16_32], %23 {strides = array<i32>} : memref<32x256xf32, #tpu.memory_space<vmem>>, vector<8x16xf32>,
    %c16_33 = arith.constant 16 : index
    %c0_34 = arith.constant 0 : index
    %25 = vector.load %arg11[%c16_33, %c0_34] : memref<392x16xf32, #tpu.memory_space<vmem>>, vector<8x16xf32>
    %c0_35 = arith.constant 0 : index
    %c32 = arith.constant 32 : index
    %26 = vector.load %arg12[%c0_35, %c32] : memref<32x256xf32, #tpu.memory_space<vmem>>, vector<8x16xf32>
    tpu.vector_store %arg12[%c0_35, %c32], %25 {strides = array<i32>} : memref<32x256xf32, #tpu.memory_space<vmem>>, vector<8x16xf32>,
    %c32_36 = arith.constant 32 : index
    %c0_37 = arith.constant 0 : index
    %27 = vector.load %arg11[%c32_36, %c0_37] : memref<392x16xf32, #tpu.memory_space<vmem>>, vector<8x16xf32>
    %c8_38 = arith.constant 8 : index
    %c32_39 = arith.constant 32 : index
    %28 = vector.load %arg12[%c8_38, %c32_39] : memref<32x256xf32, #tpu.memory_space<vmem>>, vector<8x16xf32>
    tpu.vector_store %arg12[%c8_38, %c32_39], %27 {strides = array<i32>} : memref<32x256xf32, #tpu.memory_space<vmem>>, vector<8x16xf32>,
    %c128_40 = arith.constant 128 : index
    %c0_41 = arith.constant 0 : index
    %29 = vector.load %arg11[%c128_40, %c0_41] : memref<392x16xf32, #tpu.memory_space<vmem>>, vector<8x16xf32>
    %c16_42 = arith.constant 16 : index
    %c32_43 = arith.constant 32 : index
    %30 = vector.load %arg12[%c16_42, %c32_43] : memref<32x256xf32, #tpu.memory_space<vmem>>, vector<8x16xf32>
    tpu.vector_store %arg12[%c16_42, %c32_43], %29 {strides = array<i32>} : memref<32x256xf32, #tpu.memory_space<vmem>>, vector<8x16xf32>,
    %c144 = arith.constant 144 : index
    %c0_44 = arith.constant 0 : index
    %31 = vector.load %arg11[%c144, %c0_44] : memref<392x16xf32, #tpu.memory_space<vmem>>, vector<8x16xf32>
    %c24_45 = arith.constant 24 : index
    %c32_46 = arith.constant 32 : index
    %32 = vector.load %arg12[%c24_45, %c32_46] : memref<32x256xf32, #tpu.memory_space<vmem>>, vector<8x16xf32>
    tpu.vector_store %arg12[%c24_45, %c32_46], %31 {strides = array<i32>} : memref<32x256xf32, #tpu.memory_space<vmem>>, vector<8x16xf32>,
    %c24_47 = arith.constant 24 : index
    %c0_48 = arith.constant 0 : index
    %33 = vector.load %arg11[%c24_47, %c0_48] : memref<392x16xf32, #tpu.memory_space<vmem>>, vector<8x16xf32>
    %c0_49 = arith.constant 0 : index
    %c48 = arith.constant 48 : index
    %34 = vector.load %arg12[%c0_49, %c48] : memref<32x256xf32, #tpu.memory_space<vmem>>, vector<8x16xf32>
    tpu.vector_store %arg12[%c0_49, %c48], %33 {strides = array<i32>} : memref<32x256xf32, #tpu.memory_space<vmem>>, vector<8x16xf32>,
    %c40 = arith.constant 40 : index
    %c0_50 = arith.constant 0 : index
    %35 = vector.load %arg11[%c40, %c0_50] : memref<392x16xf32, #tpu.memory_space<vmem>>, vector<8x16xf32>
    %c8_51 = arith.constant 8 : index
    %c48_52 = arith.constant 48 : index
    %36 = vector.load %arg12[%c8_51, %c48_52] : memref<32x256xf32, #tpu.memory_space<vmem>>, vector<8x16xf32>
    tpu.vector_store %arg12[%c8_51, %c48_52], %35 {strides = array<i32>} : memref<32x256xf32, #tpu.memory_space<vmem>>, vector<8x16xf32>,
    %c136_53 = arith.constant 136 : index
    %c0_54 = arith.constant 0 : index
    %37 = vector.load %arg11[%c136_53, %c0_54] : memref<392x16xf32, #tpu.memory_space<vmem>>, vector<8x16xf32>
    %c16_55 = arith.constant 16 : index
    %c48_56 = arith.constant 48 : index
    %38 = vector.load %arg12[%c16_55, %c48_56] : memref<32x256xf32, #tpu.memory_space<vmem>>, vector<8x16xf32>
    tpu.vector_store %arg12[%c16_55, %c48_56], %37 {strides = array<i32>} : memref<32x256xf32, #tpu.memory_space<vmem>>, vector<8x16xf32>,
    %c152 = arith.constant 152 : index
    %c0_57 = arith.constant 0 : index
    %39 = vector.load %arg11[%c152, %c0_57] : memref<392x16xf32, #tpu.memory_space<vmem>>, vector<8x16xf32>
    %c24_58 = arith.constant 24 : index
    %c48_59 = arith.constant 48 : index
    %40 = vector.load %arg12[%c24_58, %c48_59] : memref<32x256xf32, #tpu.memory_space<vmem>>, vector<8x16xf32>
    tpu.vector_store %arg12[%c24_58, %c48_59], %39 {strides = array<i32>} : memref<32x256xf32, #tpu.memory_space<vmem>>, vector<8x16xf32>,
    %c56 = arith.constant 56 : index
    %c0_60 = arith.constant 0 : index
    %41 = vector.load %arg11[%c56, %c0_60] : memref<392x16xf32, #tpu.memory_space<vmem>>, vector<8x16xf32>
    %c0_61 = arith.constant 0 : index
    %c64 = arith.constant 64 : index
    %42 = vector.load %arg12[%c0_61, %c64] : memref<32x256xf32, #tpu.memory_space<vmem>>, vector<8x16xf32>
    tpu.vector_store %arg12[%c0_61, %c64], %41 {strides = array<i32>} : memref<32x256xf32, #tpu.memory_space<vmem>>, vector<8x16xf32>,
    %c72 = arith.constant 72 : index
    %c0_62 = arith.constant 0 : index
    %43 = vector.load %arg11[%c72, %c0_62] : memref<392x16xf32, #tpu.memory_space<vmem>>, vector<8x16xf32>
    %c8_63 = arith.constant 8 : index
    %c64_64 = arith.constant 64 : index
    %44 = vector.load %arg12[%c8_63, %c64_64] : memref<32x256xf32, #tpu.memory_space<vmem>>, vector<8x16xf32>
    tpu.vector_store %arg12[%c8_63, %c64_64], %43 {strides = array<i32>} : memref<32x256xf32, #tpu.memory_space<vmem>>, vector<8x16xf32>,
    %c168 = arith.constant 168 : index
    %c0_65 = arith.constant 0 : index
    %45 = vector.load %arg11[%c168, %c0_65] : memref<392x16xf32, #tpu.memory_space<vmem>>, vector<8x16xf32>
    %c16_66 = arith.constant 16 : index
    %c64_67 = arith.constant 64 : index
    %46 = vector.load %arg12[%c16_66, %c64_67] : memref<32x256xf32, #tpu.memory_space<vmem>>, vector<8x16xf32>
    tpu.vector_store %arg12[%c16_66, %c64_67], %45 {strides = array<i32>} : memref<32x256xf32, #tpu.memory_space<vmem>>, vector<8x16xf32>,
    %c184 = arith.constant 184 : index
    %c0_68 = arith.constant 0 : index
    %47 = vector.load %arg11[%c184, %c0_68] : memref<392x16xf32, #tpu.memory_space<vmem>>, vector<8x16xf32>
    %c24_69 = arith.constant 24 : index
    %c64_70 = arith.constant 64 : index
    %48 = vector.load %arg12[%c24_69, %c64_70] : memref<32x256xf32, #tpu.memory_space<vmem>>, vector<8x16xf32>
    tpu.vector_store %arg12[%c24_69, %c64_70], %47 {strides = array<i32>} : memref<32x256xf32, #tpu.memory_space<vmem>>, vector<8x16xf32>,
    %c64_71 = arith.constant 64 : index
    %c0_72 = arith.constant 0 : index
    %49 = vector.load %arg11[%c64_71, %c0_72] : memref<392x16xf32, #tpu.memory_space<vmem>>, vector<8x16xf32>
    %c0_73 = arith.constant 0 : index
    %c80 = arith.constant 80 : index
    %50 = vector.load %arg12[%c0_73, %c80] : memref<32x256xf32, #tpu.memory_space<vmem>>, vector<8x16xf32>
    tpu.vector_store %arg12[%c0_73, %c80], %49 {strides = array<i32>} : memref<32x256xf32, #tpu.memory_space<vmem>>, vector<8x16xf32>,
    %c80_74 = arith.constant 80 : index
    %c0_75 = arith.constant 0 : index
    %51 = vector.load %arg11[%c80_74, %c0_75] : memref<392x16xf32, #tpu.memory_space<vmem>>, vector<8x16xf32>
    %c8_76 = arith.constant 8 : index
    %c80_77 = arith.constant 80 : index
    %52 = vector.load %arg12[%c8_76, %c80_77] : memref<32x256xf32, #tpu.memory_space<vmem>>, vector<8x16xf32>
    tpu.vector_store %arg12[%c8_76, %c80_77], %51 {strides = array<i32>} : memref<32x256xf32, #tpu.memory_space<vmem>>, vector<8x16xf32>,
    %c176 = arith.constant 176 : index
    %c0_78 = arith.constant 0 : index
    %53 = vector.load %arg11[%c176, %c0_78] : memref<392x16xf32, #tpu.memory_space<vmem>>, vector<8x16xf32>
    %c16_79 = arith.constant 16 : index
    %c80_80 = arith.constant 80 : index
    %54 = vector.load %arg12[%c16_79, %c80_80] : memref<32x256xf32, #tpu.memory_space<vmem>>, vector<8x16xf32>
    tpu.vector_store %arg12[%c16_79, %c80_80], %53 {strides = array<i32>} : memref<32x256xf32, #tpu.memory_space<vmem>>, vector<8x16xf32>,
    %c192 = arith.constant 192 : index
    %c0_81 = arith.constant 0 : index
    %55 = vector.load %arg11[%c192, %c0_81] : memref<392x16xf32, #tpu.memory_space<vmem>>, vector<8x16xf32>
    %c24_82 = arith.constant 24 : index
    %c80_83 = arith.constant 80 : index
    %56 = vector.load %arg12[%c24_82, %c80_83] : memref<32x256xf32, #tpu.memory_space<vmem>>, vector<8x16xf32>
    tpu.vector_store %arg12[%c24_82, %c80_83], %55 {strides = array<i32>} : memref<32x256xf32, #tpu.memory_space<vmem>>, vector<8x16xf32>,
    %c72_84 = arith.constant 72 : index
    %c0_85 = arith.constant 0 : index
    %57 = vector.load %arg11[%c72_84, %c0_85] : memref<392x16xf32, #tpu.memory_space<vmem>>, vector<8x16xf32>
    %c0_86 = arith.constant 0 : index
    %c96 = arith.constant 96 : index
    %58 = vector.load %arg12[%c0_86, %c96] : memref<32x256xf32, #tpu.memory_space<vmem>>, vector<8x16xf32>
    tpu.vector_store %arg12[%c0_86, %c96], %57 {strides = array<i32>} : memref<32x256xf32, #tpu.memory_space<vmem>>, vector<8x16xf32>,
    %c88 = arith.constant 88 : index
    %c0_87 = arith.constant 0 : index
    %59 = vector.load %arg11[%c88, %c0_87] : memref<392x16xf32, #tpu.memory_space<vmem>>, vector<8x16xf32>
    %c8_88 = arith.constant 8 : index
    %c96_89 = arith.constant 96 : index
    %60 = vector.load %arg12[%c8_88, %c96_89] : memref<32x256xf32, #tpu.memory_space<vmem>>, vector<8x16xf32>
    tpu.vector_store %arg12[%c8_88, %c96_89], %59 {strides = array<i32>} : memref<32x256xf32, #tpu.memory_space<vmem>>, vector<8x16xf32>,
    %c184_90 = arith.constant 184 : index
    %c0_91 = arith.constant 0 : index
    %61 = vector.load %arg11[%c184_90, %c0_91] : memref<392x16xf32, #tpu.memory_space<vmem>>, vector<8x16xf32>
    %c16_92 = arith.constant 16 : index
    %c96_93 = arith.constant 96 : index
    %62 = vector.load %arg12[%c16_92, %c96_93] : memref<32x256xf32, #tpu.memory_space<vmem>>, vector<8x16xf32>
    tpu.vector_store %arg12[%c16_92, %c96_93], %61 {strides = array<i32>} : memref<32x256xf32, #tpu.memory_space<vmem>>, vector<8x16xf32>,
    %c200 = arith.constant 200 : index
    %c0_94 = arith.constant 0 : index
    %63 = vector.load %arg11[%c200, %c0_94] : memref<392x16xf32, #tpu.memory_space<vmem>>, vector<8x16xf32>
    %c24_95 = arith.constant 24 : index
    %c96_96 = arith.constant 96 : index
    %64 = vector.load %arg12[%c24_95, %c96_96] : memref<32x256xf32, #tpu.memory_space<vmem>>, vector<8x16xf32>
    tpu.vector_store %arg12[%c24_95, %c96_96], %63 {strides = array<i32>} : memref<32x256xf32, #tpu.memory_space<vmem>>, vector<8x16xf32>,
    %c80_97 = arith.constant 80 : index
    %c0_98 = arith.constant 0 : index
    %65 = vector.load %arg11[%c80_97, %c0_98] : memref<392x16xf32, #tpu.memory_space<vmem>>, vector<8x16xf32>
    %c0_99 = arith.constant 0 : index
    %c112_100 = arith.constant 112 : index
    %66 = vector.load %arg12[%c0_99, %c112_100] : memref<32x256xf32, #tpu.memory_space<vmem>>, vector<8x16xf32>
    tpu.vector_store %arg12[%c0_99, %c112_100], %65 {strides = array<i32>} : memref<32x256xf32, #tpu.memory_space<vmem>>, vector<8x16xf32>,
    %c96_101 = arith.constant 96 : index
    %c0_102 = arith.constant 0 : index
    %67 = vector.load %arg11[%c96_101, %c0_102] : memref<392x16xf32, #tpu.memory_space<vmem>>, vector<8x16xf32>
    %c8_103 = arith.constant 8 : index
    %c112_104 = arith.constant 112 : index
    %68 = vector.load %arg12[%c8_103, %c112_104] : memref<32x256xf32, #tpu.memory_space<vmem>>, vector<8x16xf32>
    tpu.vector_store %arg12[%c8_103, %c112_104], %67 {strides = array<i32>} : memref<32x256xf32, #tpu.memory_space<vmem>>, vector<8x16xf32>,
    %c192_105 = arith.constant 192 : index
    %c0_106 = arith.constant 0 : index
    %69 = vector.load %arg11[%c192_105, %c0_106] : memref<392x16xf32, #tpu.memory_space<vmem>>, vector<8x16xf32>
    %c16_107 = arith.constant 16 : index
    %c112_108 = arith.constant 112 : index
    %70 = vector.load %arg12[%c16_107, %c112_108] : memref<32x256xf32, #tpu.memory_space<vmem>>, vector<8x16xf32>
    tpu.vector_store %arg12[%c16_107, %c112_108], %69 {strides = array<i32>} : memref<32x256xf32, #tpu.memory_space<vmem>>, vector<8x16xf32>,
    %c208 = arith.constant 208 : index
    %c0_109 = arith.constant 0 : index
    %71 = vector.load %arg11[%c208, %c0_109] : memref<392x16xf32, #tpu.memory_space<vmem>>, vector<8x16xf32>
    %c24_110 = arith.constant 24 : index
    %c112_111 = arith.constant 112 : index
    %72 = vector.load %arg12[%c24_110, %c112_111] : memref<32x256xf32, #tpu.memory_space<vmem>>, vector<8x16xf32>
    tpu.vector_store %arg12[%c24_110, %c112_111], %71 {strides = array<i32>} : memref<32x256xf32, #tpu.memory_space<vmem>>, vector<8x16xf32>,
    %c112_112 = arith.constant 112 : index
    %c0_113 = arith.constant 0 : index
    %73 = vector.load %arg11[%c112_112, %c0_113] : memref<392x16xf32, #tpu.memory_space<vmem>>, vector<8x16xf32>
    %c0_114 = arith.constant 0 : index
    %c128_115 = arith.constant 128 : index
    %74 = vector.load %arg12[%c0_114, %c128_115] : memref<32x256xf32, #tpu.memory_space<vmem>>, vector<8x16xf32>
    tpu.vector_store %arg12[%c0_114, %c128_115], %73 {strides = array<i32>} : memref<32x256xf32, #tpu.memory_space<vmem>>, vector<8x16xf32>,
    %c128_116 = arith.constant 128 : index
    %c0_117 = arith.constant 0 : index
    %75 = vector.load %arg11[%c128_116, %c0_117] : memref<392x16xf32, #tpu.memory_space<vmem>>, vector<8x16xf32>
    %c8_118 = arith.constant 8 : index
    %c128_119 = arith.constant 128 : index
    %76 = vector.load %arg12[%c8_118, %c128_119] : memref<32x256xf32, #tpu.memory_space<vmem>>, vector<8x16xf32>
    tpu.vector_store %arg12[%c8_118, %c128_119], %75 {strides = array<i32>} : memref<32x256xf32, #tpu.memory_space<vmem>>, vector<8x16xf32>,
    %c224 = arith.constant 224 : index
    %c0_120 = arith.constant 0 : index
    %77 = vector.load %arg11[%c224, %c0_120] : memref<392x16xf32, #tpu.memory_space<vmem>>, vector<8x16xf32>
    %c16_121 = arith.constant 16 : index
    %c128_122 = arith.constant 128 : index
    %78 = vector.load %arg12[%c16_121, %c128_122] : memref<32x256xf32, #tpu.memory_space<vmem>>, vector<8x16xf32>
    tpu.vector_store %arg12[%c16_121, %c128_122], %77 {strides = array<i32>} : memref<32x256xf32, #tpu.memory_space<vmem>>, vector<8x16xf32>,
    %c240 = arith.constant 240 : index
    %c0_123 = arith.constant 0 : index
    %79 = vector.load %arg11[%c240, %c0_123] : memref<392x16xf32, #tpu.memory_space<vmem>>, vector<8x16xf32>
    %c24_124 = arith.constant 24 : index
    %c128_125 = arith.constant 128 : index
    %80 = vector.load %arg12[%c24_124, %c128_125] : memref<32x256xf32, #tpu.memory_space<vmem>>, vector<8x16xf32>
    tpu.vector_store %arg12[%c24_124, %c128_125], %79 {strides = array<i32>} : memref<32x256xf32, #tpu.memory_space<vmem>>, vector<8x16xf32>,
    %c120_126 = arith.constant 120 : index
    %c0_127 = arith.constant 0 : index
    %81 = vector.load %arg11[%c120_126, %c0_127] : memref<392x16xf32, #tpu.memory_space<vmem>>, vector<8x16xf32>
    %c0_128 = arith.constant 0 : index
    %c144_129 = arith.constant 144 : index
    %82 = vector.load %arg12[%c0_128, %c144_129] : memref<32x256xf32, #tpu.memory_space<vmem>>, vector<8x16xf32>
    tpu.vector_store %arg12[%c0_128, %c144_129], %81 {strides = array<i32>} : memref<32x256xf32, #tpu.memory_space<vmem>>, vector<8x16xf32>,
    %c136_130 = arith.constant 136 : index
    %c0_131 = arith.constant 0 : index
    %83 = vector.load %arg11[%c136_130, %c0_131] : memref<392x16xf32, #tpu.memory_space<vmem>>, vector<8x16xf32>
    %c8_132 = arith.constant 8 : index
    %c144_133 = arith.constant 144 : index
    %84 = vector.load %arg12[%c8_132, %c144_133] : memref<32x256xf32, #tpu.memory_space<vmem>>, vector<8x16xf32>
    tpu.vector_store %arg12[%c8_132, %c144_133], %83 {strides = array<i32>} : memref<32x256xf32, #tpu.memory_space<vmem>>, vector<8x16xf32>,
    %c232 = arith.constant 232 : index
    %c0_134 = arith.constant 0 : index
    %85 = vector.load %arg11[%c232, %c0_134] : memref<392x16xf32, #tpu.memory_space<vmem>>, vector<8x16xf32>
    %c16_135 = arith.constant 16 : index
    %c144_136 = arith.constant 144 : index
    %86 = vector.load %arg12[%c16_135, %c144_136] : memref<32x256xf32, #tpu.memory_space<vmem>>, vector<8x16xf32>
    tpu.vector_store %arg12[%c16_135, %c144_136], %85 {strides = array<i32>} : memref<32x256xf32, #tpu.memory_space<vmem>>, vector<8x16xf32>,
    %c248 = arith.constant 248 : index
    %c0_137 = arith.constant 0 : index
    %87 = vector.load %arg11[%c248, %c0_137] : memref<392x16xf32, #tpu.memory_space<vmem>>, vector<8x16xf32>
    %c24_138 = arith.constant 24 : index
    %c144_139 = arith.constant 144 : index
    %88 = vector.load %arg12[%c24_138, %c144_139] : memref<32x256xf32, #tpu.memory_space<vmem>>, vector<8x16xf32>
    tpu.vector_store %arg12[%c24_138, %c144_139], %87 {strides = array<i32>} : memref<32x256xf32, #tpu.memory_space<vmem>>, vector<8x16xf32>,
    %c128_140 = arith.constant 128 : index
    %c0_141 = arith.constant 0 : index
    %89 = vector.load %arg11[%c128_140, %c0_141] : memref<392x16xf32, #tpu.memory_space<vmem>>, vector<8x16xf32>
    %c0_142 = arith.constant 0 : index
    %c160 = arith.constant 160 : index
    %90 = vector.load %arg12[%c0_142, %c160] : memref<32x256xf32, #tpu.memory_space<vmem>>, vector<8x16xf32>
    tpu.vector_store %arg12[%c0_142, %c160], %89 {strides = array<i32>} : memref<32x256xf32, #tpu.memory_space<vmem>>, vector<8x16xf32>,
    %c144_143 = arith.constant 144 : index
    %c0_144 = arith.constant 0 : index
    %91 = vector.load %arg11[%c144_143, %c0_144] : memref<392x16xf32, #tpu.memory_space<vmem>>, vector<8x16xf32>
    %c8_145 = arith.constant 8 : index
    %c160_146 = arith.constant 160 : index
    %92 = vector.load %arg12[%c8_145, %c160_146] : memref<32x256xf32, #tpu.memory_space<vmem>>, vector<8x16xf32>
    tpu.vector_store %arg12[%c8_145, %c160_146], %91 {strides = array<i32>} : memref<32x256xf32, #tpu.memory_space<vmem>>, vector<8x16xf32>,
    %c240_147 = arith.constant 240 : index
    %c0_148 = arith.constant 0 : index
    %93 = vector.load %arg11[%c240_147, %c0_148] : memref<392x16xf32, #tpu.memory_space<vmem>>, vector<8x16xf32>
    %c16_149 = arith.constant 16 : index
    %c160_150 = arith.constant 160 : index
    %94 = vector.load %arg12[%c16_149, %c160_150] : memref<32x256xf32, #tpu.memory_space<vmem>>, vector<8x16xf32>
    tpu.vector_store %arg12[%c16_149, %c160_150], %93 {strides = array<i32>} : memref<32x256xf32, #tpu.memory_space<vmem>>, vector<8x16xf32>,
    %c256 = arith.constant 256 : index
    %c0_151 = arith.constant 0 : index
    %95 = vector.load %arg11[%c256, %c0_151] : memref<392x16xf32, #tpu.memory_space<vmem>>, vector<8x16xf32>
    %c24_152 = arith.constant 24 : index
    %c160_153 = arith.constant 160 : index
    %96 = vector.load %arg12[%c24_152, %c160_153] : memref<32x256xf32, #tpu.memory_space<vmem>>, vector<8x16xf32>
    tpu.vector_store %arg12[%c24_152, %c160_153], %95 {strides = array<i32>} : memref<32x256xf32, #tpu.memory_space<vmem>>, vector<8x16xf32>,
    %c136_154 = arith.constant 136 : index
    %c0_155 = arith.constant 0 : index
    %97 = vector.load %arg11[%c136_154, %c0_155] : memref<392x16xf32, #tpu.memory_space<vmem>>, vector<8x16xf32>
    %c0_156 = arith.constant 0 : index
    %c176_157 = arith.constant 176 : index
    %98 = vector.load %arg12[%c0_156, %c176_157] : memref<32x256xf32, #tpu.memory_space<vmem>>, vector<8x16xf32>
    tpu.vector_store %arg12[%c0_156, %c176_157], %97 {strides = array<i32>} : memref<32x256xf32, #tpu.memory_space<vmem>>, vector<8x16xf32>,
    %c152_158 = arith.constant 152 : index
    %c0_159 = arith.constant 0 : index
    %99 = vector.load %arg11[%c152_158, %c0_159] : memref<392x16xf32, #tpu.memory_space<vmem>>, vector<8x16xf32>
    %c8_160 = arith.constant 8 : index
    %c176_161 = arith.constant 176 : index
    %100 = vector.load %arg12[%c8_160, %c176_161] : memref<32x256xf32, #tpu.memory_space<vmem>>, vector<8x16xf32>
    tpu.vector_store %arg12[%c8_160, %c176_161], %99 {strides = array<i32>} : memref<32x256xf32, #tpu.memory_space<vmem>>, vector<8x16xf32>,
    %c248_162 = arith.constant 248 : index
    %c0_163 = arith.constant 0 : index
    %101 = vector.load %arg11[%c248_162, %c0_163] : memref<392x16xf32, #tpu.memory_space<vmem>>, vector<8x16xf32>
    %c16_164 = arith.constant 16 : index
    %c176_165 = arith.constant 176 : index
    %102 = vector.load %arg12[%c16_164, %c176_165] : memref<32x256xf32, #tpu.memory_space<vmem>>, vector<8x16xf32>
    tpu.vector_store %arg12[%c16_164, %c176_165], %101 {strides = array<i32>} : memref<32x256xf32, #tpu.memory_space<vmem>>, vector<8x16xf32>,
    %c264 = arith.constant 264 : index
    %c0_166 = arith.constant 0 : index
    %103 = vector.load %arg11[%c264, %c0_166] : memref<392x16xf32, #tpu.memory_space<vmem>>, vector<8x16xf32>
    %c24_167 = arith.constant 24 : index
    %c176_168 = arith.constant 176 : index
    %104 = vector.load %arg12[%c24_167, %c176_168] : memref<32x256xf32, #tpu.memory_space<vmem>>, vector<8x16xf32>
    tpu.vector_store %arg12[%c24_167, %c176_168], %103 {strides = array<i32>} : memref<32x256xf32, #tpu.memory_space<vmem>>, vector<8x16xf32>,
    %c168_169 = arith.constant 168 : index
    %c0_170 = arith.constant 0 : index
    %105 = vector.load %arg11[%c168_169, %c0_170] : memref<392x16xf32, #tpu.memory_space<vmem>>, vector<8x16xf32>
    %c0_171 = arith.constant 0 : index
    %c192_172 = arith.constant 192 : index
    %106 = vector.load %arg12[%c0_171, %c192_172] : memref<32x256xf32, #tpu.memory_space<vmem>>, vector<8x16xf32>
    tpu.vector_store %arg12[%c0_171, %c192_172], %105 {strides = array<i32>} : memref<32x256xf32, #tpu.memory_space<vmem>>, vector<8x16xf32>,
    %c184_173 = arith.constant 184 : index
    %c0_174 = arith.constant 0 : index
    %107 = vector.load %arg11[%c184_173, %c0_174] : memref<392x16xf32, #tpu.memory_space<vmem>>, vector<8x16xf32>
    %c8_175 = arith.constant 8 : index
    %c192_176 = arith.constant 192 : index
    %108 = vector.load %arg12[%c8_175, %c192_176] : memref<32x256xf32, #tpu.memory_space<vmem>>, vector<8x16xf32>
    tpu.vector_store %arg12[%c8_175, %c192_176], %107 {strides = array<i32>} : memref<32x256xf32, #tpu.memory_space<vmem>>, vector<8x16xf32>,
    %c280 = arith.constant 280 : index
    %c0_177 = arith.constant 0 : index
    %109 = vector.load %arg11[%c280, %c0_177] : memref<392x16xf32, #tpu.memory_space<vmem>>, vector<8x16xf32>
    %c16_178 = arith.constant 16 : index
    %c192_179 = arith.constant 192 : index
    %110 = vector.load %arg12[%c16_178, %c192_179] : memref<32x256xf32, #tpu.memory_space<vmem>>, vector<8x16xf32>
    tpu.vector_store %arg12[%c16_178, %c192_179], %109 {strides = array<i32>} : memref<32x256xf32, #tpu.memory_space<vmem>>, vector<8x16xf32>,
    %c296 = arith.constant 296 : index
    %c0_180 = arith.constant 0 : index
    %111 = vector.load %arg11[%c296, %c0_180] : memref<392x16xf32, #tpu.memory_space<vmem>>, vector<8x16xf32>
    %c24_181 = arith.constant 24 : index
    %c192_182 = arith.constant 192 : index
    %112 = vector.load %arg12[%c24_181, %c192_182] : memref<32x256xf32, #tpu.memory_space<vmem>>, vector<8x16xf32>
    tpu.vector_store %arg12[%c24_181, %c192_182], %111 {strides = array<i32>} : memref<32x256xf32, #tpu.memory_space<vmem>>, vector<8x16xf32>,
    %c176_183 = arith.constant 176 : index
    %c0_184 = arith.constant 0 : index
    %113 = vector.load %arg11[%c176_183, %c0_184] : memref<392x16xf32, #tpu.memory_space<vmem>>, vector<8x16xf32>
    %c0_185 = arith.constant 0 : index
    %c208_186 = arith.constant 208 : index
    %114 = vector.load %arg12[%c0_185, %c208_186] : memref<32x256xf32, #tpu.memory_space<vmem>>, vector<8x16xf32>
    tpu.vector_store %arg12[%c0_185, %c208_186], %113 {strides = array<i32>} : memref<32x256xf32, #tpu.memory_space<vmem>>, vector<8x16xf32>,
    %c192_187 = arith.constant 192 : index
    %c0_188 = arith.constant 0 : index
    %115 = vector.load %arg11[%c192_187, %c0_188] : memref<392x16xf32, #tpu.memory_space<vmem>>, vector<8x16xf32>
    %c8_189 = arith.constant 8 : index
    %c208_190 = arith.constant 208 : index
    %116 = vector.load %arg12[%c8_189, %c208_190] : memref<32x256xf32, #tpu.memory_space<vmem>>, vector<8x16xf32>
    tpu.vector_store %arg12[%c8_189, %c208_190], %115 {strides = array<i32>} : memref<32x256xf32, #tpu.memory_space<vmem>>, vector<8x16xf32>,
    %c288 = arith.constant 288 : index
    %c0_191 = arith.constant 0 : index
    %117 = vector.load %arg11[%c288, %c0_191] : memref<392x16xf32, #tpu.memory_space<vmem>>, vector<8x16xf32>
    %c16_192 = arith.constant 16 : index
    %c208_193 = arith.constant 208 : index
    %118 = vector.load %arg12[%c16_192, %c208_193] : memref<32x256xf32, #tpu.memory_space<vmem>>, vector<8x16xf32>
    tpu.vector_store %arg12[%c16_192, %c208_193], %117 {strides = array<i32>} : memref<32x256xf32, #tpu.memory_space<vmem>>, vector<8x16xf32>,
    %c304 = arith.constant 304 : index
    %c0_194 = arith.constant 0 : index
    %119 = vector.load %arg11[%c304, %c0_194] : memref<392x16xf32, #tpu.memory_space<vmem>>, vector<8x16xf32>
    %c24_195 = arith.constant 24 : index
    %c208_196 = arith.constant 208 : index
    %120 = vector.load %arg12[%c24_195, %c208_196] : memref<32x256xf32, #tpu.memory_space<vmem>>, vector<8x16xf32>
    tpu.vector_store %arg12[%c24_195, %c208_196], %119 {strides = array<i32>} : memref<32x256xf32, #tpu.memory_space<vmem>>, vector<8x16xf32>,
    %c184_197 = arith.constant 184 : index
    %c0_198 = arith.constant 0 : index
    %121 = vector.load %arg11[%c184_197, %c0_198] : memref<392x16xf32, #tpu.memory_space<vmem>>, vector<8x16xf32>
    %c0_199 = arith.constant 0 : index
    %c224_200 = arith.constant 224 : index
    %122 = vector.load %arg12[%c0_199, %c224_200] : memref<32x256xf32, #tpu.memory_space<vmem>>, vector<8x16xf32>
    tpu.vector_store %arg12[%c0_199, %c224_200], %121 {strides = array<i32>} : memref<32x256xf32, #tpu.memory_space<vmem>>, vector<8x16xf32>,
    %c200_201 = arith.constant 200 : index
    %c0_202 = arith.constant 0 : index
    %123 = vector.load %arg11[%c200_201, %c0_202] : memref<392x16xf32, #tpu.memory_space<vmem>>, vector<8x16xf32>
    %c8_203 = arith.constant 8 : index
    %c224_204 = arith.constant 224 : index
    %124 = vector.load %arg12[%c8_203, %c224_204] : memref<32x256xf32, #tpu.memory_space<vmem>>, vector<8x16xf32>
    tpu.vector_store %arg12[%c8_203, %c224_204], %123 {strides = array<i32>} : memref<32x256xf32, #tpu.memory_space<vmem>>, vector<8x16xf32>,
    %c296_205 = arith.constant 296 : index
    %c0_206 = arith.constant 0 : index
    %125 = vector.load %arg11[%c296_205, %c0_206] : memref<392x16xf32, #tpu.memory_space<vmem>>, vector<8x16xf32>
    %c16_207 = arith.constant 16 : index
    %c224_208 = arith.constant 224 : index
    %126 = vector.load %arg12[%c16_207, %c224_208] : memref<32x256xf32, #tpu.memory_space<vmem>>, vector<8x16xf32>
    tpu.vector_store %arg12[%c16_207, %c224_208], %125 {strides = array<i32>} : memref<32x256xf32, #tpu.memory_space<vmem>>, vector<8x16xf32>,
    %c312 = arith.constant 312 : index
    %c0_209 = arith.constant 0 : index
    %127 = vector.load %arg11[%c312, %c0_209] : memref<392x16xf32, #tpu.memory_space<vmem>>, vector<8x16xf32>
    %c24_210 = arith.constant 24 : index
    %c224_211 = arith.constant 224 : index
    %128 = vector.load %arg12[%c24_210, %c224_211] : memref<32x256xf32, #tpu.memory_space<vmem>>, vector<8x16xf32>
    tpu.vector_store %arg12[%c24_210, %c224_211], %127 {strides = array<i32>} : memref<32x256xf32, #tpu.memory_space<vmem>>, vector<8x16xf32>,
    %c192_212 = arith.constant 192 : index
    %c0_213 = arith.constant 0 : index
    %129 = vector.load %arg11[%c192_212, %c0_213] : memref<392x16xf32, #tpu.memory_space<vmem>>, vector<8x16xf32>
    %c0_214 = arith.constant 0 : index
    %c240_215 = arith.constant 240 : index
    %130 = vector.load %arg12[%c0_214, %c240_215] : memref<32x256xf32, #tpu.memory_space<vmem>>, vector<8x16xf32>
    tpu.vector_store %arg12[%c0_214, %c240_215], %129 {strides = array<i32>} : memref<32x256xf32, #tpu.memory_space<vmem>>, vector<8x16xf32>,
    %c208_216 = arith.constant 208 : index
    %c0_217 = arith.constant 0 : index
    %131 = vector.load %arg11[%c208_216, %c0_217] : memref<392x16xf32, #tpu.memory_space<vmem>>, vector<8x16xf32>
    %c8_218 = arith.constant 8 : index
    %c240_219 = arith.constant 240 : index
    %132 = vector.load %arg12[%c8_218, %c240_219] : memref<32x256xf32, #tpu.memory_space<vmem>>, vector<8x16xf32>
    tpu.vector_store %arg12[%c8_218, %c240_219], %131 {strides = array<i32>} : memref<32x256xf32, #tpu.memory_space<vmem>>, vector<8x16xf32>,
    %c304_220 = arith.constant 304 : index
    %c0_221 = arith.constant 0 : index
    %133 = vector.load %arg11[%c304_220, %c0_221] : memref<392x16xf32, #tpu.memory_space<vmem>>, vector<8x16xf32>
    %c16_222 = arith.constant 16 : index
    %c240_223 = arith.constant 240 : index
    %134 = vector.load %arg12[%c16_222, %c240_223] : memref<32x256xf32, #tpu.memory_space<vmem>>, vector<8x16xf32>
    tpu.vector_store %arg12[%c16_222, %c240_223], %133 {strides = array<i32>} : memref<32x256xf32, #tpu.memory_space<vmem>>, vector<8x16xf32>,
    %c320 = arith.constant 320 : index
    %c0_224 = arith.constant 0 : index
    %135 = vector.load %arg11[%c320, %c0_224] : memref<392x16xf32, #tpu.memory_space<vmem>>, vector<8x16xf32>
    %c24_225 = arith.constant 24 : index
    %c240_226 = arith.constant 240 : index
    %136 = vector.load %arg12[%c24_225, %c240_226] : memref<32x256xf32, #tpu.memory_space<vmem>>, vector<8x16xf32>
    tpu.vector_store %arg12[%c24_225, %c240_226], %135 {strides = array<i32>} : memref<32x256xf32, #tpu.memory_space<vmem>>, vector<8x16xf32>,
    %c0_227 = arith.constant 0 : index
    %c0_228 = arith.constant 0 : index
    %137 = vector.load %arg12[%c0_227, %c0_228] : memref<32x256xf32, #tpu.memory_space<vmem>>, vector<32x256xf32>
    %c0_229 = arith.constant 0 : index
    %c0_230 = arith.constant 0 : index
    %138 = vector.load %arg4[%c0_229, %c0_230] : memref<256x32xf32, #tpu.memory_space<vmem>>, vector<256x32xf32>
    %cst_231 = arith.constant dense<0.000000e+00> : vector<32x32xf32>
    %139 = tpu.matmul %137, %138, %cst_231 {dimension_numbers = #tpu.dot_dimension_numbers<[1], [0], [0], [1], [0, 0, 1, 1], [], []>} : vector<32x256xf32>, vector<256x32xf32>, vector<32x32xf32> -> vector<32x32xf32>
    %c0_232 = arith.constant 0 : index
    %c0_233 = arith.constant 0 : index
    %140 = vector.load %arg5[%c0_232, %c0_233] : memref<1x32xf32, #tpu.memory_space<vmem>>, vector<1x32xf32>
    %141 = vector.broadcast %140 : vector<1x32xf32> to vector<32x32xf32>
    %142 = arith.addf %139, %141 : vector<32x32xf32>
    %cst_234 = arith.constant 0.000000e+00 : f32
    %143 = vector.broadcast %cst_234 : f32 to vector<32x32xf32>
    %144 = arith.maximumf %142, %143 : vector<32x32xf32>
    %c0_235 = arith.constant 0 : index
    %c0_236 = arith.constant 0 : index
    %145 = vector.load %arg13[%c0_235, %c0_236] : memref<32x32xf32, #tpu.memory_space<vmem>>, vector<32x32xf32>
    tpu.vector_store %arg13[%c0_235, %c0_236], %144 {strides = array<i32>} : memref<32x32xf32, #tpu.memory_space<vmem>>, vector<32x32xf32>,
    %c0_237 = arith.constant 0 : index
    %c0_238 = arith.constant 0 : index
    %146 = vector.load %arg13[%c0_237, %c0_238] : memref<32x32xf32, #tpu.memory_space<vmem>>, vector<8x32xf32>
    %c0_239 = arith.constant 0 : index
    %c0_240 = arith.constant 0 : index
    %147 = vector.load %arg14[%c0_239, %c0_240] : memref<8x128xf32, #tpu.memory_space<vmem>>, vector<8x32xf32>
    tpu.vector_store %arg14[%c0_239, %c0_240], %146 {strides = array<i32>} : memref<8x128xf32, #tpu.memory_space<vmem>>, vector<8x32xf32>,
    %c8_241 = arith.constant 8 : index
    %c0_242 = arith.constant 0 : index
    %148 = vector.load %arg13[%c8_241, %c0_242] : memref<32x32xf32, #tpu.memory_space<vmem>>, vector<8x32xf32>
    %c0_243 = arith.constant 0 : index
    %c32_244 = arith.constant 32 : index
    %149 = vector.load %arg14[%c0_243, %c32_244] : memref<8x128xf32, #tpu.memory_space<vmem>>, vector<8x32xf32>
    tpu.vector_store %arg14[%c0_243, %c32_244], %148 {strides = array<i32>} : memref<8x128xf32, #tpu.memory_space<vmem>>, vector<8x32xf32>,
    %c16_245 = arith.constant 16 : index
    %c0_246 = arith.constant 0 : index
    %150 = vector.load %arg13[%c16_245, %c0_246] : memref<32x32xf32, #tpu.memory_space<vmem>>, vector<8x32xf32>
    %c0_247 = arith.constant 0 : index
    %c64_248 = arith.constant 64 : index
    %151 = vector.load %arg14[%c0_247, %c64_248] : memref<8x128xf32, #tpu.memory_space<vmem>>, vector<8x32xf32>
    tpu.vector_store %arg14[%c0_247, %c64_248], %150 {strides = array<i32>} : memref<8x128xf32, #tpu.memory_space<vmem>>, vector<8x32xf32>,
    %c24_249 = arith.constant 24 : index
    %c0_250 = arith.constant 0 : index
    %152 = vector.load %arg13[%c24_249, %c0_250] : memref<32x32xf32, #tpu.memory_space<vmem>>, vector<8x32xf32>
    %c0_251 = arith.constant 0 : index
    %c96_252 = arith.constant 96 : index
    %153 = vector.load %arg14[%c0_251, %c96_252] : memref<8x128xf32, #tpu.memory_space<vmem>>, vector<8x32xf32>
    tpu.vector_store %arg14[%c0_251, %c96_252], %152 {strides = array<i32>} : memref<8x128xf32, #tpu.memory_space<vmem>>, vector<8x32xf32>,
    %c0_253 = arith.constant 0 : index
    %c0_254 = arith.constant 0 : index
    %154 = vector.load %arg14[%c0_253, %c0_254] : memref<8x128xf32, #tpu.memory_space<vmem>>, vector<8x128xf32>
    %c0_255 = arith.constant 0 : index
    %c0_256 = arith.constant 0 : index
    %155 = vector.load %arg6[%c0_255, %c0_256] : memref<128x256xf32, #tpu.memory_space<vmem>>, vector<128x256xf32>
    %cst_257 = arith.constant dense<0.000000e+00> : vector<8x256xf32>
    %156 = tpu.matmul %154, %155, %cst_257 {dimension_numbers = #tpu.dot_dimension_numbers<[1], [0], [0], [1], [0, 0, 1, 1], [], []>} : vector<8x128xf32>, vector<128x256xf32>, vector<8x256xf32> -> vector<8x256xf32>
    %c0_258 = arith.constant 0 : index
    %c0_259 = arith.constant 0 : index
    %157 = vector.load %arg7[%c0_258, %c0_259] : memref<1x256xf32, #tpu.memory_space<vmem>>, vector<1x256xf32>
    %158 = vector.broadcast %157 : vector<1x256xf32> to vector<8x256xf32>
    %159 = arith.addf %156, %158 : vector<8x256xf32>
    %cst_260 = arith.constant 0.000000e+00 : f32
    %160 = vector.broadcast %cst_260 : f32 to vector<8x256xf32>
    %161 = arith.maximumf %159, %160 : vector<8x256xf32>
    %c0_261 = arith.constant 0 : index
    %c0_262 = arith.constant 0 : index
    %162 = vector.load %arg8[%c0_261, %c0_262] : memref<256x128xf32, #tpu.memory_space<vmem>>, vector<256x128xf32>
    %cst_263 = arith.constant dense<0.000000e+00> : vector<8x128xf32>
    %163 = tpu.matmul %161, %162, %cst_263 {dimension_numbers = #tpu.dot_dimension_numbers<[1], [0], [0], [1], [0, 0, 1, 1], [], []>} : vector<8x256xf32>, vector<256x128xf32>, vector<8x128xf32> -> vector<8x128xf32>
    %c0_264 = arith.constant 0 : index
    %c0_265 = arith.constant 0 : index
    %164 = vector.load %arg9[%c0_264, %c0_265] : memref<1x128xf32, #tpu.memory_space<vmem>>, vector<1x128xf32>
    %165 = vector.broadcast %164 : vector<1x128xf32> to vector<8x128xf32>
    %166 = arith.addf %163, %165 : vector<8x128xf32>
    %c0_266 = arith.constant 0 : index
    %c0_267 = arith.constant 0 : index
    %167 = vector.load %arg10[%c0_266, %c0_267] : memref<8x128xf32, #tpu.memory_space<vmem>>, vector<8x128xf32>
    tpu.vector_store %arg10[%c0_266, %c0_267], %166 {strides = array<i32>} : memref<8x128xf32, #tpu.memory_space<vmem>>, vector<8x128xf32>,
    return
  }
  func.func @transform_0(%arg0: i32) -> (i32, i32) {
    %c0_i32 = arith.constant 0 : i32
    %c0_i32_0 = arith.constant 0 : i32
    return %arg0, %c0_i32 : i32, i32
  }
  func.func @transform_1(%arg0: i32) -> (i32, i32) {
    %c0_i32 = arith.constant 0 : i32
    %c0_i32_0 = arith.constant 0 : i32
    %c0_i32_1 = arith.constant 0 : i32
    return %c0_i32, %c0_i32_0 : i32, i32
  }
  func.func @transform_2(%arg0: i32) -> (i32, i32) {
    %c0_i32 = arith.constant 0 : i32
    %c0_i32_0 = arith.constant 0 : i32
    %c0_i32_1 = arith.constant 0 : i32
    return %c0_i32, %c0_i32_0 : i32, i32
  }
  func.func @transform_3(%arg0: i32) -> (i32, i32) {
    %c0_i32 = arith.constant 0 : i32
    %c0_i32_0 = arith.constant 0 : i32
    %c0_i32_1 = arith.constant 0 : i32
    return %c0_i32, %c0_i32_0 : i32, i32
  }
  func.func @transform_4(%arg0: i32) -> (i32, i32) {
    %c0_i32 = arith.constant 0 : i32
    %c0_i32_0 = arith.constant 0 : i32
    %c0_i32_1 = arith.constant 0 : i32
    return %c0_i32, %c0_i32_0 : i32, i32
  }
  func.func @transform_5(%arg0: i32) -> (i32, i32) {
    %c0_i32 = arith.constant 0 : i32
    %c0_i32_0 = arith.constant 0 : i32
    %c0_i32_1 = arith.constant 0 : i32
    return %c0_i32, %c0_i32_0 : i32, i32
  }
  func.func @transform_6(%arg0: i32) -> (i32, i32) {
    %c0_i32 = arith.constant 0 : i32
    %c0_i32_0 = arith.constant 0 : i32
    %c0_i32_1 = arith.constant 0 : i32
    return %c0_i32, %c0_i32_0 : i32, i32
  }
  func.func @transform_7(%arg0: i32) -> (i32, i32) {
    %c0_i32 = arith.constant 0 : i32
    %c0_i32_0 = arith.constant 0 : i32
    %c0_i32_1 = arith.constant 0 : i32
    return %c0_i32, %c0_i32_0 : i32, i32
  }
  func.func @transform_8(%arg0: i32) -> (i32, i32) {
    %c0_i32 = arith.constant 0 : i32
    %c0_i32_0 = arith.constant 0 : i32
    %c0_i32_1 = arith.constant 0 : i32
    return %c0_i32, %c0_i32_0 : i32, i32
  }
  func.func @transform_9(%arg0: i32) -> (i32, i32) {
    %c0_i32 = arith.constant 0 : i32
    %c0_i32_0 = arith.constant 0 : i32
    return %arg0, %c0_i32 : i32, i32
  }
}

</mosaic_0001>

<llo_original>
// kernel: forward.1
$region0: #{forward.1}
  #allocation0 [shape = 'u32[]', space=smem, size = 0x4, offset = 0x4, fixed_abs, tag = 'smem constant byte address 0x4 - core index']
  #allocation1 [shape = 'u32[144,128]{1,0:T(1,128)}', space=vmem, size = 0x12000, scoped, tag = 'internal scratch']
  #allocation2 [shape = 'f32[392,16]{1,0:T(8,128)}', space=vmem, size = 0x31000, scoped, tag = 'scratch operand']
  #allocation3 [shape = 'f32[32,256]{1,0:T(8,128)}', space=vmem, size = 0x8000, scoped, tag = 'scratch operand']
  #allocation4 [shape = 'f32[32,32]{1,0:T(8,128)}', space=vmem, size = 0x4000, scoped, tag = 'scratch operand']
  #allocation5 [shape = 'f32[8,128]{1,0:T(8,128)}', space=vmem, size = 0x1000, scoped, tag = 'scratch operand']
  %s0 = inlined_call_operand.vmem [shape: f32[392,256], index: 0, kind: input, shape index: {}]
  %s1 = inlined_call_operand.vmem [shape: f32[256,16], index: 1, kind: input, shape index: {}]
  %s2 = inlined_call_operand.vmem [shape: f32[1,16], index: 2, kind: input, shape index: {}]
  %s3 = inlined_call_operand.vmem [shape: f32[256,32], index: 3, kind: input, shape index: {}]
  %s4 = inlined_call_operand.vmem [shape: f32[1,32], index: 4, kind: input, shape index: {}]
  %s5 = inlined_call_operand.vmem [shape: f32[128,256], index: 5, kind: input, shape index: {}]
  %s6 = inlined_call_operand.vmem [shape: f32[1,256], index: 6, kind: input, shape index: {}]
  %s7 = inlined_call_operand.vmem [shape: f32[256,128], index: 7, kind: input, shape index: {}]
  %s8 = inlined_call_operand.vmem [shape: f32[1,128], index: 8, kind: input, shape index: {}]
  %s9 = inlined_call_operand.vmem [shape: f32[8,128], index: 9, kind: output, shape index: {}]
  %s10 = sld [smem:[#allocation0]]
  $region46: #{forward.1} parent=0
    _
  %s12 = ssub.s32 1, %s10
  %s13 = scalar_select 0, %s12, %s10
  // Predicated region
  $region2: #{forward.1} parent=0 // pred_check
    _
  $region3: #{forward.1} parent=0 // pred_check_branch
    %15 = sbr.rel (0) target = $region5
  $region4: #{forward.1} parent=0 // pred_region
    _
  $region5: #{forward.1} parent=0 // pred_fallthru
    _
  // Predicated region
  $region6: #{forward.1} parent=0 // pred_check
    _
  $region7: #{forward.1} parent=0 // pred_check_branch
    %17 = sbr.rel (0) target = $region9
  $region8: #{forward.1} parent=0 // pred_region
    _
  $region9: #{forward.1} parent=0 // pred_fallthru
    _
  // Predicated region
  $region10: #{forward.1} parent=0 // pred_check
    _
  $region11: #{forward.1} parent=0 // pred_check_branch
    %19 = sbr.rel (0) target = $region13
  $region12: #{forward.1} parent=0 // pred_region
    _
  $region13: #{forward.1} parent=0 // pred_fallthru
    _
  // Predicated region
  $region14: #{forward.1} parent=0 // pred_check
    _
  $region15: #{forward.1} parent=0 // pred_check_branch
    %21 = sbr.rel (0) target = $region17
  $region16: #{forward.1} parent=0 // pred_region
    _
  $region17: #{forward.1} parent=0 // pred_fallthru
    _
  // Predicated region
  $region18: #{forward.1} parent=0 // pred_check
    _
  $region19: #{forward.1} parent=0 // pred_check_branch
    %23 = sbr.rel (0) target = $region21
  $region20: #{forward.1} parent=0 // pred_region
    _
  $region21: #{forward.1} parent=0 // pred_fallthru
    _
  // Predicated region
  $region22: #{forward.1} parent=0 // pred_check
    _
  $region23: #{forward.1} parent=0 // pred_check_branch
    %25 = sbr.rel (0) target = $region25
  $region24: #{forward.1} parent=0 // pred_region
    _
  $region25: #{forward.1} parent=0 // pred_fallthru
    _
  // Predicated region
  $region26: #{forward.1} parent=0 // pred_check
    _
  $region27: #{forward.1} parent=0 // pred_check_branch
    %27 = sbr.rel (0) target = $region29
  $region28: #{forward.1} parent=0 // pred_region
    _
  $region29: #{forward.1} parent=0 // pred_fallthru
    _
  // Predicated region
  $region30: #{forward.1} parent=0 // pred_check
    _
  $region31: #{forward.1} parent=0 // pred_check_branch
    %29 = sbr.rel (0) target = $region33
  $region32: #{forward.1} parent=0 // pred_region
    _
  $region33: #{forward.1} parent=0 // pred_fallthru
    _
  // Predicated region
  $region34: #{forward.1} parent=0 // pred_check
    _
  $region35: #{forward.1} parent=0 // pred_check_branch
    %31 = sbr.rel (0) target = $region37
  $region36: #{forward.1} parent=0 // pred_region
    _
  $region37: #{forward.1} parent=0 // pred_fallthru
    _
  %v32 = vld [vmem:[%s0] sm:$0xff]
  %v33 = vld [vmem:[%s0 + $0x8] sm:$0xff]
  %v34 = vld [vmem:[%s0 + $0x10] sm:$0xff]
  %v35 = vld [vmem:[%s0 + $0x18] sm:$0xff]
  %v36 = vld [vmem:[%s0 + $0x20] sm:$0xff]
  %v37 = vld [vmem:[%s0 + $0x28] sm:$0xff]
  %v38 = vld [vmem:[%s0 + $0x30] sm:$0xff]
  %v39 = vld [vmem:[%s0 + $0x38] sm:$0xff]
  %v40 = vld [vmem:[%s0 + $0x40] sm:$0xff]
  %v41 = vld [vmem:[%s0 + $0x48] sm:$0xff]
  %v42 = vld [vmem:[%s0 + $0x50] sm:$0xff]
  %v43 = vld [vmem:[%s0 + $0x58] sm:$0xff]
  %v44 = vld [vmem:[%s0 + $0x60] sm:$0xff]
  %v45 = vld [vmem:[%s0 + $0x68] sm:$0xff]
  %v46 = vld [vmem:[%s0 + $0x70] sm:$0xff]
  %v47 = vld [vmem:[%s0 + $0x78] sm:$0xff]
  %v48 = vld [vmem:[%s0 + $0x80] sm:$0xff]
  %v49 = vld [vmem:[%s0 + $0x88] sm:$0xff]
  %v50 = vld [vmem:[%s0 + $0x90] sm:$0xff]
  %v51 = vld [vmem:[%s0 + $0x98] sm:$0xff]
  %v52 = vld [vmem:[%s0 + $0xa0] sm:$0xff]
  %v53 = vld [vmem:[%s0 + $0xa8] sm:$0xff]
  %v54 = vld [vmem:[%s0 + $0xb0] sm:$0xff]
  %v55 = vld [vmem:[%s0 + $0xb8] sm:$0xff]
  %v56 = vld [vmem:[%s0 + $0xc0] sm:$0xff]
  %v57 = vld [vmem:[%s0 + $0xc8] sm:$0xff]
  %v58 = vld [vmem:[%s0 + $0xd0] sm:$0xff]
  %v59 = vld [vmem:[%s0 + $0xd8] sm:$0xff]
  %v60 = vld [vmem:[%s0 + $0xe0] sm:$0xff]
  %v61 = vld [vmem:[%s0 + $0xe8] sm:$0xff]
  %v62 = vld [vmem:[%s0 + $0xf0] sm:$0xff]
  %v63 = vld [vmem:[%s0 + $0xf8] sm:$0xff]
  %v64 = vld [vmem:[%s0 + $0x100] sm:$0xff]
  %v65 = vld [vmem:[%s0 + $0x108] sm:$0xff]
  %v66 = vld [vmem:[%s0 + $0x110] sm:$0xff]
  %v67 = vld [vmem:[%s0 + $0x118] sm:$0xff]
  %v68 = vld [vmem:[%s0 + $0x120] sm:$0xff]
  %v69 = vld [vmem:[%s0 + $0x128] sm:$0xff]
  %v70 = vld [vmem:[%s0 + $0x130] sm:$0xff]
  %v71 = vld [vmem:[%s0 + $0x138] sm:$0xff]
  %v72 = vld [vmem:[%s0 + $0x140] sm:$0xff]
  %v73 = vld [vmem:[%s0 + $0x148] sm:$0xff]
  %v74 = vld [vmem:[%s0 + $0x150] sm:$0xff]
  %v75 = vld [vmem:[%s0 + $0x158] sm:$0xff]
  %v76 = vld [vmem:[%s0 + $0x160] sm:$0xff]
  %v77 = vld [vmem:[%s0 + $0x168] sm:$0xff]
  %v78 = vld [vmem:[%s0 + $0x170] sm:$0xff]
  %v79 = vld [vmem:[%s0 + $0x178] sm:$0xff]
  %v80 = vld [vmem:[%s0 + $0x180] sm:$0xff]
  %v81 = vld [vmem:[%s0 + $0x188] sm:$0xff]
  %v82 = vld [vmem:[%s0 + $0x190] sm:$0xff]
  %v83 = vld [vmem:[%s0 + $0x198] sm:$0xff]
  %v84 = vld [vmem:[%s0 + $0x1a0] sm:$0xff]
  %v85 = vld [vmem:[%s0 + $0x1a8] sm:$0xff]
  %v86 = vld [vmem:[%s0 + $0x1b0] sm:$0xff]
  %v87 = vld [vmem:[%s0 + $0x1b8] sm:$0xff]
  %v88 = vld [vmem:[%s0 + $0x1c0] sm:$0xff]
  %v89 = vld [vmem:[%s0 + $0x1c8] sm:$0xff]
  %v90 = vld [vmem:[%s0 + $0x1d0] sm:$0xff]
  %v91 = vld [vmem:[%s0 + $0x1d8] sm:$0xff]
  %v92 = vld [vmem:[%s0 + $0x1e0] sm:$0xff]
  %v93 = vld [vmem:[%s0 + $0x1e8] sm:$0xff]
  %v94 = vld [vmem:[%s0 + $0x1f0] sm:$0xff]
  %v95 = vld [vmem:[%s0 + $0x1f8] sm:$0xff]
  %v96 = vld [vmem:[%s0 + $0x200] sm:$0xff]
  %v97 = vld [vmem:[%s0 + $0x208] sm:$0xff]
  %v98 = vld [vmem:[%s0 + $0x210] sm:$0xff]
  %v99 = vld [vmem:[%s0 + $0x218] sm:$0xff]
  %v100 = vld [vmem:[%s0 + $0x220] sm:$0xff]
  %v101 = vld [vmem:[%s0 + $0x228] sm:$0xff]
  %v102 = vld [vmem:[%s0 + $0x230] sm:$0xff]
  %v103 = vld [vmem:[%s0 + $0x238] sm:$0xff]
  %v104 = vld [vmem:[%s0 + $0x240] sm:$0xff]
  %v105 = vld [vmem:[%s0 + $0x248] sm:$0xff]
  %v106 = vld [vmem:[%s0 + $0x250] sm:$0xff]
  %v107 = vld [vmem:[%s0 + $0x258] sm:$0xff]
  %v108 = vld [vmem:[%s0 + $0x260] sm:$0xff]
  %v109 = vld [vmem:[%s0 + $0x268] sm:$0xff]
  %v110 = vld [vmem:[%s0 + $0x270] sm:$0xff]
  %v111 = vld [vmem:[%s0 + $0x278] sm:$0xff]
  %v112 = vld [vmem:[%s0 + $0x280] sm:$0xff]
  %v113 = vld [vmem:[%s0 + $0x288] sm:$0xff]
  %v114 = vld [vmem:[%s0 + $0x290] sm:$0xff]
  %v115 = vld [vmem:[%s0 + $0x298] sm:$0xff]
  %v116 = vld [vmem:[%s0 + $0x2a0] sm:$0xff]
  %v117 = vld [vmem:[%s0 + $0x2a8] sm:$0xff]
  %v118 = vld [vmem:[%s0 + $0x2b0] sm:$0xff]
  %v119 = vld [vmem:[%s0 + $0x2b8] sm:$0xff]
  %v120 = vld [vmem:[%s0 + $0x2c0] sm:$0xff]
  %v121 = vld [vmem:[%s0 + $0x2c8] sm:$0xff]
  %v122 = vld [vmem:[%s0 + $0x2d0] sm:$0xff]
  %v123 = vld [vmem:[%s0 + $0x2d8] sm:$0xff]
  %v124 = vld [vmem:[%s0 + $0x2e0] sm:$0xff]
  %v125 = vld [vmem:[%s0 + $0x2e8] sm:$0xff]
  %v126 = vld [vmem:[%s0 + $0x2f0] sm:$0xff]
  %v127 = vld [vmem:[%s0 + $0x2f8] sm:$0xff]
  %v128 = vld [vmem:[%s0 + $0x300] sm:$0xff]
  %v129 = vld [vmem:[%s0 + $0x308] sm:$0xff]
  %v130 = vld [vmem:[%s1] sm:$0xff]
  %v131 = vld [vmem:[%s1 + $0x8] sm:$0xff]
  %v132 = vld [vmem:[%s1 + $0x10] sm:$0xff]
  %v133 = vld [vmem:[%s1 + $0x18] sm:$0xff]
  %v134 = vld [vmem:[%s1 + $0x20] sm:$0xff]
  %v135 = vld [vmem:[%s1 + $0x28] sm:$0xff]
  %v136 = vld [vmem:[%s1 + $0x30] sm:$0xff]
  %v137 = vld [vmem:[%s1 + $0x38] sm:$0xff]
  %v138 = vld [vmem:[%s1 + $0x40] sm:$0xff]
  %v139 = vld [vmem:[%s1 + $0x48] sm:$0xff]
  %v140 = vld [vmem:[%s1 + $0x50] sm:$0xff]
  %v141 = vld [vmem:[%s1 + $0x58] sm:$0xff]
  %v142 = vld [vmem:[%s1 + $0x60] sm:$0xff]
  %v143 = vld [vmem:[%s1 + $0x68] sm:$0xff]
  %v144 = vld [vmem:[%s1 + $0x70] sm:$0xff]
  %v145 = vld [vmem:[%s1 + $0x78] sm:$0xff]
  %v146 = vld [vmem:[%s1 + $0x80] sm:$0xff]
  %v147 = vld [vmem:[%s1 + $0x88] sm:$0xff]
  %v148 = vld [vmem:[%s1 + $0x90] sm:$0xff]
  %v149 = vld [vmem:[%s1 + $0x98] sm:$0xff]
  %v150 = vld [vmem:[%s1 + $0xa0] sm:$0xff]
  %v151 = vld [vmem:[%s1 + $0xa8] sm:$0xff]
  %v152 = vld [vmem:[%s1 + $0xb0] sm:$0xff]
  %v153 = vld [vmem:[%s1 + $0xb8] sm:$0xff]
  %v154 = vld [vmem:[%s1 + $0xc0] sm:$0xff]
  %v155 = vld [vmem:[%s1 + $0xc8] sm:$0xff]
  %v156 = vld [vmem:[%s1 + $0xd0] sm:$0xff]
  %v157 = vld [vmem:[%s1 + $0xd8] sm:$0xff]
  %v158 = vld [vmem:[%s1 + $0xe0] sm:$0xff]
  %v159 = vld [vmem:[%s1 + $0xe8] sm:$0xff]
  %v160 = vld [vmem:[%s1 + $0xf0] sm:$0xff]
  %v161 = vld [vmem:[%s1 + $0xf8] sm:$0xff]
  %v162 = vld [vmem:[%s2] sm:$0x1]
  %v164 = vlaneseq
  %v165 = vshrl.u32 %v164, 7
  %v166 = vsub.s32 0, %v165
  %v167 = vrot.slane %v162, %v166
  %169 = vmatprep.subr.mxu0 0.0
  %170 = vmatpush1.msra.mxu0 %v145
  %171 = vmatprep.subr.mxu0 0.0
  %172 = vmatpush1.msra.mxu0 %v144
  %173 = vmatprep.subr.mxu0 0.0
  %174 = vmatpush1.msra.mxu0 %v143
  %175 = vmatprep.subr.mxu0 0.0
  %176 = vmatpush1.msra.mxu0 %v142
  %177 = vmatprep.subr.mxu0 0.0
  %178 = vmatpush1.msra.mxu0 %v141
  %179 = vmatprep.subr.mxu0 0.0
  %180 = vmatpush1.msra.mxu0 %v140
  %181 = vmatprep.subr.mxu0 0.0
  %182 = vmatpush1.msra.mxu0 %v139
  %183 = vmatprep.subr.mxu0 0.0
  %184 = vmatpush1.msra.mxu0 %v138
  %185 = vmatprep.subr.mxu0 0.0
  %186 = vmatpush1.msra.mxu0 %v137
  %187 = vmatprep.subr.mxu0 0.0
  %188 = vmatpush1.msra.mxu0 %v136
  %189 = vmatprep.subr.mxu0 0.0
  %190 = vmatpush1.msra.mxu0 %v135
  %191 = vmatprep.subr.mxu0 0.0
  %192 = vmatpush1.msra.mxu0 %v134
  %193 = vmatprep.subr.mxu0 0.0
  %194 = vmatpush1.msra.mxu0 %v133
  %195 = vmatprep.subr.mxu0 0.0
  %196 = vmatpush1.msra.mxu0 %v132
  %197 = vmatprep.subr.mxu0 0.0
  %198 = vmatpush1.msra.mxu0 %v131
  %199 = vmatprep.subr.mxu0 0.0
  %200 = vmatpush1.msra.mxu0 %v130
  %201 = vmatprep.subr.mxu0 0.0
  %202 = vmatpush2.msra.mxu0 %v161
  %203 = vmatprep.subr.mxu0 0.0
  %204 = vmatpush2.msra.mxu0 %v160
  %205 = vmatprep.subr.mxu0 0.0
  %206 = vmatpush2.msra.mxu0 %v159
  %207 = vmatprep.subr.mxu0 0.0
  %208 = vmatpush2.msra.mxu0 %v158
  %209 = vmatprep.subr.mxu0 0.0
  %210 = vmatpush2.msra.mxu0 %v157
  %211 = vmatprep.subr.mxu0 0.0
  %212 = vmatpush2.msra.mxu0 %v156
  %213 = vmatprep.subr.mxu0 0.0
  %214 = vmatpush2.msra.mxu0 %v155
  %215 = vmatprep.subr.mxu0 0.0
  %216 = vmatpush2.msra.mxu0 %v154
  %217 = vmatprep.subr.mxu0 0.0
  %218 = vmatpush2.msra.mxu0 %v153
  %219 = vmatprep.subr.mxu0 0.0
  %220 = vmatpush2.msra.mxu0 %v152
  %221 = vmatprep.subr.mxu0 0.0
  %222 = vmatpush2.msra.mxu0 %v151
  %223 = vmatprep.subr.mxu0 0.0
  %224 = vmatpush2.msra.mxu0 %v150
  %225 = vmatprep.subr.mxu0 0.0
  %226 = vmatpush2.msra.mxu0 %v149
  %227 = vmatprep.subr.mxu0 0.0
  %228 = vmatpush2.msra.mxu0 %v148
  %229 = vmatprep.subr.mxu0 0.0
  %230 = vmatpush2.msra.mxu0 %v147
  %231 = vmatprep.subr.mxu0 0.0
  %232 = vmatpush2.msra.mxu0 %v146
  %233 = vmatprep.mubr.f32.mxu0 %v33
  %234 = vmatmul.mubr.f32.gmra.mxu0 %v32
  %v235 = vpop.f32.mrf.mxu0
  %v236 = vadd.f32 %v167, %v235
  %v237 = vpop.f32.mrf.mxu0
  %238 = vmatprep.mubr.f32.mxu0 %v35
  %239 = vmatmul.mubr.f32.gmra.mxu0 %v34
  %v240 = vpop.f32.mrf.mxu0
  %v241 = vadd.f32 %v167, %v240
  %v242 = vpop.f32.mrf.mxu0
  %243 = vmatprep.mubr.f32.mxu0 %v37
  %244 = vmatmul.mubr.f32.gmra.mxu0 %v36
  %v245 = vpop.f32.mrf.mxu0
  %v246 = vadd.f32 %v167, %v245
  %v247 = vpop.f32.mrf.mxu0
  %248 = vmatprep.mubr.f32.mxu0 %v39
  %249 = vmatmul.mubr.f32.gmra.mxu0 %v38
  %v250 = vpop.f32.mrf.mxu0
  %v251 = vadd.f32 %v167, %v250
  %v252 = vpop.f32.mrf.mxu0
  %253 = vmatprep.mubr.f32.mxu0 %v41
  %254 = vmatmul.mubr.f32.gmra.mxu0 %v40
  %v255 = vpop.f32.mrf.mxu0
  %v256 = vadd.f32 %v167, %v255
  %v257 = vpop.f32.mrf.mxu0
  %258 = vmatprep.mubr.f32.mxu0 %v43
  %259 = vmatmul.mubr.f32.gmra.mxu0 %v42
  %v260 = vpop.f32.mrf.mxu0
  %v261 = vadd.f32 %v167, %v260
  %v262 = vpop.f32.mrf.mxu0
  %263 = vmatprep.mubr.f32.mxu0 %v45
  %264 = vmatmul.mubr.f32.gmra.mxu0 %v44
  %v265 = vpop.f32.mrf.mxu0
  %v266 = vadd.f32 %v167, %v265
  %v267 = vpop.f32.mrf.mxu0
  %268 = vmatprep.mubr.f32.mxu0 %v47
  %269 = vmatmul.mubr.f32.gmra.mxu0 %v46
  %v270 = vpop.f32.mrf.mxu0
  %v271 = vadd.f32 %v167, %v270
  %v272 = vpop.f32.mrf.mxu0
  %273 = vmatprep.mubr.f32.mxu0 %v49
  %274 = vmatmul.mubr.f32.gmra.mxu0 %v48
  %v275 = vpop.f32.mrf.mxu0
  %v276 = vadd.f32 %v167, %v275
  %v277 = vpop.f32.mrf.mxu0
  %278 = vmatprep.mubr.f32.mxu0 %v51
  %279 = vmatmul.mubr.f32.gmra.mxu0 %v50
  %v280 = vpop.f32.mrf.mxu0
  %v281 = vadd.f32 %v167, %v280
  %v282 = vpop.f32.mrf.mxu0
  %283 = vmatprep.mubr.f32.mxu0 %v53
  %284 = vmatmul.mubr.f32.gmra.mxu0 %v52
  %v285 = vpop.f32.mrf.mxu0
  %v286 = vadd.f32 %v167, %v285
  %v287 = vpop.f32.mrf.mxu0
  %288 = vmatprep.mubr.f32.mxu0 %v55
  %289 = vmatmul.mubr.f32.gmra.mxu0 %v54
  %v290 = vpop.f32.mrf.mxu0
  %v291 = vadd.f32 %v167, %v290
  %v292 = vpop.f32.mrf.mxu0
  %293 = vmatprep.mubr.f32.mxu0 %v57
  %294 = vmatmul.mubr.f32.gmra.mxu0 %v56
  %v295 = vpop.f32.mrf.mxu0
  %v296 = vadd.f32 %v167, %v295
  %v297 = vpop.f32.mrf.mxu0
  %298 = vmatprep.mubr.f32.mxu0 %v59
  %299 = vmatmul.mubr.f32.gmra.mxu0 %v58
  %v300 = vpop.f32.mrf.mxu0
  %v301 = vadd.f32 %v167, %v300
  %v302 = vpop.f32.mrf.mxu0
  %303 = vmatprep.mubr.f32.mxu0 %v61
  %304 = vmatmul.mubr.f32.gmra.mxu0 %v60
  %v305 = vpop.f32.mrf.mxu0
  %v306 = vadd.f32 %v167, %v305
  %v307 = vpop.f32.mrf.mxu0
  %308 = vmatprep.mubr.f32.mxu0 %v63
  %309 = vmatmul.mubr.f32.gmra.mxu0 %v62
  %v310 = vpop.f32.mrf.mxu0
  %v311 = vadd.f32 %v167, %v310
  %v312 = vpop.f32.mrf.mxu0
  %313 = vmatprep.mubr.f32.mxu0 %v65
  %314 = vmatmul.mubr.f32.gmra.mxu0 %v64
  %v315 = vpop.f32.mrf.mxu0
  %v316 = vadd.f32 %v167, %v315
  %v317 = vpop.f32.mrf.mxu0
  %318 = vmatprep.mubr.f32.mxu0 %v67
  %319 = vmatmul.mubr.f32.gmra.mxu0 %v66
  %v320 = vpop.f32.mrf.mxu0
  %v321 = vadd.f32 %v167, %v320
  %v322 = vpop.f32.mrf.mxu0
  %323 = vmatprep.mubr.f32.mxu0 %v69
  %324 = vmatmul.mubr.f32.gmra.mxu0 %v68
  %v325 = vpop.f32.mrf.mxu0
  %v326 = vadd.f32 %v167, %v325
  %v327 = vpop.f32.mrf.mxu0
  %328 = vmatprep.mubr.f32.mxu0 %v71
  %329 = vmatmul.mubr.f32.gmra.mxu0 %v70
  %v330 = vpop.f32.mrf.mxu0
  %v331 = vadd.f32 %v167, %v330
  %v332 = vpop.f32.mrf.mxu0
  %333 = vmatprep.mubr.f32.mxu0 %v73
  %334 = vmatmul.mubr.f32.gmra.mxu0 %v72
  %v335 = vpop.f32.mrf.mxu0
  %v336 = vadd.f32 %v167, %v335
  %v337 = vpop.f32.mrf.mxu0
  %338 = vmatprep.mubr.f32.mxu0 %v75
  %339 = vmatmul.mubr.f32.gmra.mxu0 %v74
  %v340 = vpop.f32.mrf.mxu0
  %v341 = vadd.f32 %v167, %v340
  %v342 = vpop.f32.mrf.mxu0
  %343 = vmatprep.mubr.f32.mxu0 %v77
  %344 = vmatmul.mubr.f32.gmra.mxu0 %v76
  %v345 = vpop.f32.mrf.mxu0
  %v346 = vadd.f32 %v167, %v345
  %v347 = vpop.f32.mrf.mxu0
  %348 = vmatprep.mubr.f32.mxu0 %v79
  %349 = vmatmul.mubr.f32.gmra.mxu0 %v78
  %v350 = vpop.f32.mrf.mxu0
  %v351 = vadd.f32 %v167, %v350
  %v352 = vpop.f32.mrf.mxu0
  %353 = vmatprep.mubr.f32.mxu0 %v81
  %354 = vmatmul.mubr.f32.gmra.mxu0 %v80
  %v355 = vpop.f32.mrf.mxu0
  %v356 = vadd.f32 %v167, %v355
  %v357 = vpop.f32.mrf.mxu0
  %358 = vmatprep.mubr.f32.mxu0 %v83
  %359 = vmatmul.mubr.f32.gmra.mxu0 %v82
  %v360 = vpop.f32.mrf.mxu0
  %v361 = vadd.f32 %v167, %v360
  %v362 = vpop.f32.mrf.mxu0
  %363 = vmatprep.mubr.f32.mxu0 %v85
  %364 = vmatmul.mubr.f32.gmra.mxu0 %v84
  %v365 = vpop.f32.mrf.mxu0
  %v366 = vadd.f32 %v167, %v365
  %v367 = vpop.f32.mrf.mxu0
  %368 = vmatprep.mubr.f32.mxu0 %v87
  %369 = vmatmul.mubr.f32.gmra.mxu0 %v86
  %v370 = vpop.f32.mrf.mxu0
  %v371 = vadd.f32 %v167, %v370
  %v372 = vpop.f32.mrf.mxu0
  %373 = vmatprep.mubr.f32.mxu0 %v89
  %374 = vmatmul.mubr.f32.gmra.mxu0 %v88
  %v375 = vpop.f32.mrf.mxu0
  %v376 = vadd.f32 %v167, %v375
  %v377 = vpop.f32.mrf.mxu0
  %378 = vmatprep.mubr.f32.mxu0 %v91
  %379 = vmatmul.mubr.f32.gmra.mxu0 %v90
  %v380 = vpop.f32.mrf.mxu0
  %v381 = vadd.f32 %v167, %v380
  %v382 = vpop.f32.mrf.mxu0
  %383 = vmatprep.mubr.f32.mxu0 %v93
  %384 = vmatmul.mubr.f32.gmra.mxu0 %v92
  %v385 = vpop.f32.mrf.mxu0
  %v386 = vadd.f32 %v167, %v385
  %v387 = vpop.f32.mrf.mxu0
  %388 = vmatprep.mubr.f32.mxu0 %v95
  %389 = vmatmul.mubr.f32.gmra.mxu0 %v94
  %v390 = vpop.f32.mrf.mxu0
  %v391 = vadd.f32 %v167, %v390
  %v392 = vpop.f32.mrf.mxu0
  %393 = vmatprep.mubr.f32.mxu0 %v97
  %394 = vmatmul.mubr.f32.gmra.mxu0 %v96
  %v395 = vpop.f32.mrf.mxu0
  %v396 = vadd.f32 %v167, %v395
  %v397 = vpop.f32.mrf.mxu0
  %398 = vmatprep.mubr.f32.mxu0 %v99
  %399 = vmatmul.mubr.f32.gmra.mxu0 %v98
  %v400 = vpop.f32.mrf.mxu0
  %v401 = vadd.f32 %v167, %v400
  %v402 = vpop.f32.mrf.mxu0
  %403 = vmatprep.mubr.f32.mxu0 %v101
  %404 = vmatmul.mubr.f32.gmra.mxu0 %v100
  %v405 = vpop.f32.mrf.mxu0
  %v406 = vadd.f32 %v167, %v405
  %v407 = vpop.f32.mrf.mxu0
  %408 = vmatprep.mubr.f32.mxu0 %v103
  %409 = vmatmul.mubr.f32.gmra.mxu0 %v102
  %v410 = vpop.f32.mrf.mxu0
  %v411 = vadd.f32 %v167, %v410
  %v412 = vpop.f32.mrf.mxu0
  %413 = vmatprep.mubr.f32.mxu0 %v105
  %414 = vmatmul.mubr.f32.gmra.mxu0 %v104
  %v415 = vpop.f32.mrf.mxu0
  %v416 = vadd.f32 %v167, %v415
  %v417 = vpop.f32.mrf.mxu0
  %418 = vmatprep.mubr.f32.mxu0 %v107
  %419 = vmatmul.mubr.f32.gmra.mxu0 %v106
  %v420 = vpop.f32.mrf.mxu0
  %v421 = vadd.f32 %v167, %v420
  %v422 = vpop.f32.mrf.mxu0
  %423 = vmatprep.mubr.f32.mxu0 %v109
  %424 = vmatmul.mubr.f32.gmra.mxu0 %v108
  %v425 = vpop.f32.mrf.mxu0
  %v426 = vadd.f32 %v167, %v425
  %v427 = vpop.f32.mrf.mxu0
  %428 = vmatprep.mubr.f32.mxu0 %v111
  %429 = vmatmul.mubr.f32.gmra.mxu0 %v110
  %v430 = vpop.f32.mrf.mxu0
  %v431 = vadd.f32 %v167, %v430
  %v432 = vpop.f32.mrf.mxu0
  %433 = vmatprep.mubr.f32.mxu0 %v113
  %434 = vmatmul.mubr.f32.gmra.mxu0 %v112
  %v435 = vpop.f32.mrf.mxu0
  %v436 = vadd.f32 %v167, %v435
  %v437 = vpop.f32.mrf.mxu0
  %438 = vmatprep.mubr.f32.mxu0 %v115
  %439 = vmatmul.mubr.f32.gmra.mxu0 %v114
  %v440 = vpop.f32.mrf.mxu0
  %v441 = vadd.f32 %v167, %v440
  %v442 = vpop.f32.mrf.mxu0
  %443 = vmatprep.mubr.f32.mxu0 %v117
  %444 = vmatmul.mubr.f32.gmra.mxu0 %v116
  %v445 = vpop.f32.mrf.mxu0
  %v446 = vadd.f32 %v167, %v445
  %v447 = vpop.f32.mrf.mxu0
  %448 = vmatprep.mubr.f32.mxu0 %v119
  %449 = vmatmul.mubr.f32.gmra.mxu0 %v118
  %v450 = vpop.f32.mrf.mxu0
  %v451 = vadd.f32 %v167, %v450
  %v452 = vpop.f32.mrf.mxu0
  %453 = vmatprep.mubr.f32.mxu0 %v121
  %454 = vmatmul.mubr.f32.gmra.mxu0 %v120
  %v455 = vpop.f32.mrf.mxu0
  %v456 = vadd.f32 %v167, %v455
  %v457 = vpop.f32.mrf.mxu0
  %458 = vmatprep.mubr.f32.mxu0 %v123
  %459 = vmatmul.mubr.f32.gmra.mxu0 %v122
  %v460 = vpop.f32.mrf.mxu0
  %v461 = vadd.f32 %v167, %v460
  %v462 = vpop.f32.mrf.mxu0
  %463 = vmatprep.mubr.f32.mxu0 %v125
  %464 = vmatmul.mubr.f32.gmra.mxu0 %v124
  %v465 = vpop.f32.mrf.mxu0
  %v466 = vadd.f32 %v167, %v465
  %v467 = vpop.f32.mrf.mxu0
  %468 = vmatprep.mubr.f32.mxu0 %v127
  %469 = vmatmul.mubr.f32.gmra.mxu0 %v126
  %v470 = vpop.f32.mrf.mxu0
  %v471 = vadd.f32 %v167, %v470
  %v472 = vpop.f32.mrf.mxu0
  %473 = vmatprep.mubr.f32.mxu0 %v129
  %474 = vmatmul.mubr.f32.gmra.mxu0 %v128
  %v475 = vpop.f32.mrf.mxu0
  %v476 = vadd.f32 %v167, %v475
  %v477 = vpop.f32.mrf.mxu0
  %478 = vdwg.mxu0
  %v479 = vmax.f32 %v236, 0.0
  %v480 = vmax.f32 %v241, 0.0
  %v481 = vmax.f32 %v246, 0.0
  %v482 = vmax.f32 %v251, 0.0
  %v483 = vmax.f32 %v256, 0.0
  %v484 = vmax.f32 %v261, 0.0
  %v485 = vmax.f32 %v266, 0.0
  %v486 = vmax.f32 %v271, 0.0
  %v487 = vmax.f32 %v276, 0.0
  %v488 = vmax.f32 %v281, 0.0
  %v489 = vmax.f32 %v286, 0.0
  %v490 = vmax.f32 %v291, 0.0
  %v491 = vmax.f32 %v296, 0.0
  %v492 = vmax.f32 %v301, 0.0
  %v493 = vmax.f32 %v306, 0.0
  %v494 = vmax.f32 %v311, 0.0
  %v495 = vmax.f32 %v316, 0.0
  %v496 = vmax.f32 %v321, 0.0
  %v497 = vmax.f32 %v326, 0.0
  %v498 = vmax.f32 %v331, 0.0
  %v499 = vmax.f32 %v336, 0.0
  %v500 = vmax.f32 %v341, 0.0
  %v501 = vmax.f32 %v346, 0.0
  %v502 = vmax.f32 %v351, 0.0
  %v503 = vmax.f32 %v356, 0.0
  %v504 = vmax.f32 %v361, 0.0
  %v505 = vmax.f32 %v366, 0.0
  %v506 = vmax.f32 %v371, 0.0
  %v507 = vmax.f32 %v376, 0.0
  %v508 = vmax.f32 %v381, 0.0
  %v509 = vmax.f32 %v386, 0.0
  %v510 = vmax.f32 %v391, 0.0
  %v511 = vmax.f32 %v396, 0.0
  %v512 = vmax.f32 %v401, 0.0
  %v513 = vmax.f32 %v406, 0.0
  %v514 = vmax.f32 %v411, 0.0
  %v515 = vmax.f32 %v416, 0.0
  %v516 = vmax.f32 %v421, 0.0
  %v517 = vmax.f32 %v426, 0.0
  %v518 = vmax.f32 %v431, 0.0
  %v519 = vmax.f32 %v436, 0.0
  %v520 = vmax.f32 %v441, 0.0
  %v521 = vmax.f32 %v446, 0.0
  %v522 = vmax.f32 %v451, 0.0
  %v523 = vmax.f32 %v456, 0.0
  %v524 = vmax.f32 %v461, 0.0
  %v525 = vmax.f32 %v466, 0.0
  %v526 = vmax.f32 %v471, 0.0
  %v527 = vmax.f32 %v476, 0.0
  %vm528 = vcmask 130048
  %529 = vst.msk [vmem:[#allocation2] sm:$0xff] %vm528, %v479
  %530 = vst.msk [vmem:[#allocation2 + $0x8] sm:$0xff] %vm528, %v480
  %531 = vst.msk [vmem:[#allocation2 + $0x10] sm:$0xff] %vm528, %v481
  %532 = vst.msk [vmem:[#allocation2 + $0x18] sm:$0xff] %vm528, %v482
  %533 = vst.msk [vmem:[#allocation2 + $0x20] sm:$0xff] %vm528, %v483
  %534 = vst.msk [vmem:[#allocation2 + $0x28] sm:$0xff] %vm528, %v484
  %535 = vst.msk [vmem:[#allocation2 + $0x30] sm:$0xff] %vm528, %v485
  %536 = vst.msk [vmem:[#allocation2 + $0x38] sm:$0xff] %vm528, %v486
  %537 = vst.msk [vmem:[#allocation2 + $0x40] sm:$0xff] %vm528, %v487
  %538 = vst.msk [vmem:[#allocation2 + $0x48] sm:$0xff] %vm528, %v488
  %539 = vst.msk [vmem:[#allocation2 + $0x50] sm:$0xff] %vm528, %v489
  %540 = vst.msk [vmem:[#allocation2 + $0x58] sm:$0xff] %vm528, %v490
  %541 = vst.msk [vmem:[#allocation2 + $0x60] sm:$0xff] %vm528, %v491
  %542 = vst.msk [vmem:[#allocation2 + $0x68] sm:$0xff] %vm528, %v492
  %543 = vst.msk [vmem:[#allocation2 + $0x70] sm:$0xff] %vm528, %v493
  %544 = vst.msk [vmem:[#allocation2 + $0x78] sm:$0xff] %vm528, %v494
  %545 = vst.msk [vmem:[#allocation2 + $0x80] sm:$0xff] %vm528, %v495
  %546 = vst.msk [vmem:[#allocation2 + $0x88] sm:$0xff] %vm528, %v496
  %547 = vst.msk [vmem:[#allocation2 + $0x90] sm:$0xff] %vm528, %v497
  %548 = vst.msk [vmem:[#allocation2 + $0x98] sm:$0xff] %vm528, %v498
  %549 = vst.msk [vmem:[#allocation2 + $0xa0] sm:$0xff] %vm528, %v499
  %550 = vst.msk [vmem:[#allocation2 + $0xa8] sm:$0xff] %vm528, %v500
  %551 = vst.msk [vmem:[#allocation2 + $0xb0] sm:$0xff] %vm528, %v501
  %552 = vst.msk [vmem:[#allocation2 + $0xb8] sm:$0xff] %vm528, %v502
  %553 = vst.msk [vmem:[#allocation2 + $0xc0] sm:$0xff] %vm528, %v503
  %554 = vst.msk [vmem:[#allocation2 + $0xc8] sm:$0xff] %vm528, %v504
  %555 = vst.msk [vmem:[#allocation2 + $0xd0] sm:$0xff] %vm528, %v505
  %556 = vst.msk [vmem:[#allocation2 + $0xd8] sm:$0xff] %vm528, %v506
  %557 = vst.msk [vmem:[#allocation2 + $0xe0] sm:$0xff] %vm528, %v507
  %558 = vst.msk [vmem:[#allocation2 + $0xe8] sm:$0xff] %vm528, %v508
  %559 = vst.msk [vmem:[#allocation2 + $0xf0] sm:$0xff] %vm528, %v509
  %560 = vst.msk [vmem:[#allocation2 + $0xf8] sm:$0xff] %vm528, %v510
  %561 = vst.msk [vmem:[#allocation2 + $0x100] sm:$0xff] %vm528, %v511
  %562 = vst.msk [vmem:[#allocation2 + $0x108] sm:$0xff] %vm528, %v512
  %563 = vst.msk [vmem:[#allocation2 + $0x110] sm:$0xff] %vm528, %v513
  %564 = vst.msk [vmem:[#allocation2 + $0x118] sm:$0xff] %vm528, %v514
  %565 = vst.msk [vmem:[#allocation2 + $0x120] sm:$0xff] %vm528, %v515
  %566 = vst.msk [vmem:[#allocation2 + $0x128] sm:$0xff] %vm528, %v516
  %567 = vst.msk [vmem:[#allocation2 + $0x130] sm:$0xff] %vm528, %v517
  %568 = vst.msk [vmem:[#allocation2 + $0x138] sm:$0xff] %vm528, %v518
  %569 = vst.msk [vmem:[#allocation2 + $0x140] sm:$0xff] %vm528, %v519
  %570 = vst.msk [vmem:[#allocation2 + $0x148] sm:$0xff] %vm528, %v520
  %571 = vst.msk [vmem:[#allocation2 + $0x150] sm:$0xff] %vm528, %v521
  %572 = vst.msk [vmem:[#allocation2 + $0x158] sm:$0xff] %vm528, %v522
  %573 = vst.msk [vmem:[#allocation2 + $0x160] sm:$0xff] %vm528, %v523
  %574 = vst.msk [vmem:[#allocation2 + $0x168] sm:$0xff] %vm528, %v524
  %575 = vst.msk [vmem:[#allocation2 + $0x170] sm:$0xff] %vm528, %v525
  %576 = vst.msk [vmem:[#allocation2 + $0x178] sm:$0xff] %vm528, %v526
  %577 = vst.msk [vmem:[#allocation2 + $0x180] sm:$0xff] %vm528, %v527
  %v578 = vld [vmem:[#allocation2] sm:$0xff]
  %579 = vst.msk [vmem:[#allocation3] sm:$0xff] %vm528, %v578
  %v580 = vld [vmem:[#allocation2 + $0x10] sm:$0xff]
  %581 = vst.msk [vmem:[#allocation3 + $0x10] sm:$0xff] %vm528, %v580
  %v582 = vld [vmem:[#allocation2 + $0x70] sm:$0xff]
  %583 = vst.msk [vmem:[#allocation3 + $0x20] sm:$0xff] %vm528, %v582
  %v584 = vld [vmem:[#allocation2 + $0x80] sm:$0xff]
  %585 = vst.msk [vmem:[#allocation3 + $0x30] sm:$0xff] %vm528, %v584
  %v586 = vld [vmem:[#allocation2 + $0x8] sm:$0xff]
  %588 = vrot.lane.b32.xlu0 %v586, 16
  %v589 = vpop.permute.xlu0 %588
  %vm591 = vcmask 261248
  %592 = vst.msk [vmem:[#allocation3] sm:$0xff] %vm591, %v589
  %v593 = vld [vmem:[#allocation2 + $0x18] sm:$0xff]
  %595 = vrot.lane.b32.xlu0 %v593, 16
  %v596 = vpop.permute.xlu0 %595
  %598 = vst.msk [vmem:[#allocation3 + $0x10] sm:$0xff] %vm591, %v596
  %v599 = vld [vmem:[#allocation2 + $0x78] sm:$0xff]
  %601 = vrot.lane.b32.xlu0 %v599, 16
  %v602 = vpop.permute.xlu0 %601
  %604 = vst.msk [vmem:[#allocation3 + $0x20] sm:$0xff] %vm591, %v602
  %v605 = vld [vmem:[#allocation2 + $0x88] sm:$0xff]
  %607 = vrot.lane.b32.xlu0 %v605, 16
  %v608 = vpop.permute.xlu0 %607
  %610 = vst.msk [vmem:[#allocation3 + $0x30] sm:$0xff] %vm591, %v608
  %v611 = vld [vmem:[#allocation2 + $0x10] sm:$0xff]
  %613 = vrot.lane.b32.xlu0 %v611, 32
  %v614 = vpop.permute.xlu0 %613
  %vm616 = vcmask 392448
  %617 = vst.msk [vmem:[#allocation3] sm:$0xff] %vm616, %v614
  %v618 = vld [vmem:[#allocation2 + $0x20] sm:$0xff]
  %620 = vrot.lane.b32.xlu0 %v618, 32
  %v621 = vpop.permute.xlu0 %620
  %623 = vst.msk [vmem:[#allocation3 + $0x10] sm:$0xff] %vm616, %v621
  %v624 = vld [vmem:[#allocation2 + $0x80] sm:$0xff]
  %626 = vrot.lane.b32.xlu0 %v624, 32
  %v627 = vpop.permute.xlu0 %626
  %629 = vst.msk [vmem:[#allocation3 + $0x20] sm:$0xff] %vm616, %v627
  %v630 = vld [vmem:[#allocation2 + $0x90] sm:$0xff]
  %632 = vrot.lane.b32.xlu0 %v630, 32
  %v633 = vpop.permute.xlu0 %632
  %635 = vst.msk [vmem:[#allocation3 + $0x30] sm:$0xff] %vm616, %v633
  %v636 = vld [vmem:[#allocation2 + $0x18] sm:$0xff]
  %638 = vrot.lane.b32.xlu0 %v636, 48
  %v639 = vpop.permute.xlu0 %638
  %vm641 = vcmask 523648
  %642 = vst.msk [vmem:[#allocation3] sm:$0xff] %vm641, %v639
  %v643 = vld [vmem:[#allocation2 + $0x28] sm:$0xff]
  %645 = vrot.lane.b32.xlu0 %v643, 48
  %v646 = vpop.permute.xlu0 %645
  %648 = vst.msk [vmem:[#allocation3 + $0x10] sm:$0xff] %vm641, %v646
  %v649 = vld [vmem:[#allocation2 + $0x88] sm:$0xff]
  %651 = vrot.lane.b32.xlu0 %v649, 48
  %v652 = vpop.permute.xlu0 %651
  %654 = vst.msk [vmem:[#allocation3 + $0x20] sm:$0xff] %vm641, %v652
  %v655 = vld [vmem:[#allocation2 + $0x98] sm:$0xff]
  %657 = vrot.lane.b32.xlu0 %v655, 48
  %v658 = vpop.permute.xlu0 %657
  %660 = vst.msk [vmem:[#allocation3 + $0x30] sm:$0xff] %vm641, %v658
  %v661 = vld [vmem:[#allocation2 + $0x38] sm:$0xff]
  %663 = vrot.lane.b32.xlu0 %v661, 64
  %v664 = vpop.permute.xlu0 %663
  %vm666 = vcmask 654848
  %667 = vst.msk [vmem:[#allocation3] sm:$0xff] %vm666, %v664
  %v668 = vld [vmem:[#allocation2 + $0x48] sm:$0xff]
  %670 = vrot.lane.b32.xlu0 %v668, 64
  %v671 = vpop.permute.xlu0 %670
  %673 = vst.msk [vmem:[#allocation3 + $0x10] sm:$0xff] %vm666, %v671
  %v674 = vld [vmem:[#allocation2 + $0xa8] sm:$0xff]
  %676 = vrot.lane.b32.xlu0 %v674, 64
  %v677 = vpop.permute.xlu0 %676
  %679 = vst.msk [vmem:[#allocation3 + $0x20] sm:$0xff] %vm666, %v677
  %v680 = vld [vmem:[#allocation2 + $0xb8] sm:$0xff]
  %682 = vrot.lane.b32.xlu0 %v680, 64
  %v683 = vpop.permute.xlu0 %682
  %685 = vst.msk [vmem:[#allocation3 + $0x30] sm:$0xff] %vm666, %v683
  %v686 = vld [vmem:[#allocation2 + $0x40] sm:$0xff]
  %688 = vrot.lane.b32.xlu0 %v686, 80
  %v689 = vpop.permute.xlu0 %688
  %vm691 = vcmask 786048
  %692 = vst.msk [vmem:[#allocation3] sm:$0xff] %vm691, %v689
  %v693 = vld [vmem:[#allocation2 + $0x50] sm:$0xff]
  %695 = vrot.lane.b32.xlu0 %v693, 80
  %v696 = vpop.permute.xlu0 %695
  %698 = vst.msk [vmem:[#allocation3 + $0x10] sm:$0xff] %vm691, %v696
  %v699 = vld [vmem:[#allocation2 + $0xb0] sm:$0xff]
  %701 = vrot.lane.b32.xlu0 %v699, 80
  %v702 = vpop.permute.xlu0 %701
  %704 = vst.msk [vmem:[#allocation3 + $0x20] sm:$0xff] %vm691, %v702
  %v705 = vld [vmem:[#allocation2 + $0xc0] sm:$0xff]
  %707 = vrot.lane.b32.xlu0 %v705, 80
  %v708 = vpop.permute.xlu0 %707
  %710 = vst.msk [vmem:[#allocation3 + $0x30] sm:$0xff] %vm691, %v708
  %v711 = vld [vmem:[#allocation2 + $0x48] sm:$0xff]
  %713 = vrot.lane.b32.xlu0 %v711, 96
  %v714 = vpop.permute.xlu0 %713
  %vm716 = vcmask 917248
  %717 = vst.msk [vmem:[#allocation3] sm:$0xff] %vm716, %v714
  %v718 = vld [vmem:[#allocation2 + $0x58] sm:$0xff]
  %720 = vrot.lane.b32.xlu0 %v718, 96
  %v721 = vpop.permute.xlu0 %720
  %723 = vst.msk [vmem:[#allocation3 + $0x10] sm:$0xff] %vm716, %v721
  %v724 = vld [vmem:[#allocation2 + $0xb8] sm:$0xff]
  %726 = vrot.lane.b32.xlu0 %v724, 96
  %v727 = vpop.permute.xlu0 %726
  %729 = vst.msk [vmem:[#allocation3 + $0x20] sm:$0xff] %vm716, %v727
  %v730 = vld [vmem:[#allocation2 + $0xc8] sm:$0xff]
  %732 = vrot.lane.b32.xlu0 %v730, 96
  %v733 = vpop.permute.xlu0 %732
  %735 = vst.msk [vmem:[#allocation3 + $0x30] sm:$0xff] %vm716, %v733
  %v736 = vld [vmem:[#allocation2 + $0x50] sm:$0xff]
  %738 = vrot.lane.b32.xlu0 %v736, 112
  %v739 = vpop.permute.xlu0 %738
  %vm741 = vcmask 1048448
  %742 = vst.msk [vmem:[#allocation3] sm:$0xff] %vm741, %v739
  %v743 = vld [vmem:[#allocation2 + $0x60] sm:$0xff]
  %745 = vrot.lane.b32.xlu0 %v743, 112
  %v746 = vpop.permute.xlu0 %745
  %748 = vst.msk [vmem:[#allocation3 + $0x10] sm:$0xff] %vm741, %v746
  %v749 = vld [vmem:[#allocation2 + $0xc0] sm:$0xff]
  %751 = vrot.lane.b32.xlu0 %v749, 112
  %v752 = vpop.permute.xlu0 %751
  %754 = vst.msk [vmem:[#allocation3 + $0x20] sm:$0xff] %vm741, %v752
  %v755 = vld [vmem:[#allocation2 + $0xd0] sm:$0xff]
  %757 = vrot.lane.b32.xlu0 %v755, 112
  %v758 = vpop.permute.xlu0 %757
  %760 = vst.msk [vmem:[#allocation3 + $0x30] sm:$0xff] %vm741, %v758
  %v761 = vld [vmem:[#allocation2 + $0x70] sm:$0xff]
  %762 = vst.msk [vmem:[#allocation3 + $0x8] sm:$0xff] %vm528, %v761
  %v763 = vld [vmem:[#allocation2 + $0x80] sm:$0xff]
  %764 = vst.msk [vmem:[#allocation3 + $0x18] sm:$0xff] %vm528, %v763
  %v765 = vld [vmem:[#allocation2 + $0xe0] sm:$0xff]
  %766 = vst.msk [vmem:[#allocation3 + $0x28] sm:$0xff] %vm528, %v765
  %v767 = vld [vmem:[#allocation2 + $0xf0] sm:$0xff]
  %768 = vst.msk [vmem:[#allocation3 + $0x38] sm:$0xff] %vm528, %v767
  %v769 = vld [vmem:[#allocation2 + $0x78] sm:$0xff]
  %771 = vrot.lane.b32.xlu0 %v769, 16
  %v772 = vpop.permute.xlu0 %771
  %774 = vst.msk [vmem:[#allocation3 + $0x8] sm:$0xff] %vm591, %v772
  %v775 = vld [vmem:[#allocation2 + $0x88] sm:$0xff]
  %777 = vrot.lane.b32.xlu0 %v775, 16
  %v778 = vpop.permute.xlu0 %777
  %780 = vst.msk [vmem:[#allocation3 + $0x18] sm:$0xff] %vm591, %v778
  %v781 = vld [vmem:[#allocation2 + $0xe8] sm:$0xff]
  %783 = vrot.lane.b32.xlu0 %v781, 16
  %v784 = vpop.permute.xlu0 %783
  %786 = vst.msk [vmem:[#allocation3 + $0x28] sm:$0xff] %vm591, %v784
  %v787 = vld [vmem:[#allocation2 + $0xf8] sm:$0xff]
  %789 = vrot.lane.b32.xlu0 %v787, 16
  %v790 = vpop.permute.xlu0 %789
  %792 = vst.msk [vmem:[#allocation3 + $0x38] sm:$0xff] %vm591, %v790
  %v793 = vld [vmem:[#allocation2 + $0x80] sm:$0xff]
  %795 = vrot.lane.b32.xlu0 %v793, 32
  %v796 = vpop.permute.xlu0 %795
  %798 = vst.msk [vmem:[#allocation3 + $0x8] sm:$0xff] %vm616, %v796
  %v799 = vld [vmem:[#allocation2 + $0x90] sm:$0xff]
  %801 = vrot.lane.b32.xlu0 %v799, 32
  %v802 = vpop.permute.xlu0 %801
  %804 = vst.msk [vmem:[#allocation3 + $0x18] sm:$0xff] %vm616, %v802
  %v805 = vld [vmem:[#allocation2 + $0xf0] sm:$0xff]
  %807 = vrot.lane.b32.xlu0 %v805, 32
  %v808 = vpop.permute.xlu0 %807
  %810 = vst.msk [vmem:[#allocation3 + $0x28] sm:$0xff] %vm616, %v808
  %v811 = vld [vmem:[#allocation2 + $0x100] sm:$0xff]
  %813 = vrot.lane.b32.xlu0 %v811, 32
  %v814 = vpop.permute.xlu0 %813
  %816 = vst.msk [vmem:[#allocation3 + $0x38] sm:$0xff] %vm616, %v814
  %v817 = vld [vmem:[#allocation2 + $0x88] sm:$0xff]
  %819 = vrot.lane.b32.xlu0 %v817, 48
  %v820 = vpop.permute.xlu0 %819
  %822 = vst.msk [vmem:[#allocation3 + $0x8] sm:$0xff] %vm641, %v820
  %v823 = vld [vmem:[#allocation2 + $0x98] sm:$0xff]
  %825 = vrot.lane.b32.xlu0 %v823, 48
  %v826 = vpop.permute.xlu0 %825
  %828 = vst.msk [vmem:[#allocation3 + $0x18] sm:$0xff] %vm641, %v826
  %v829 = vld [vmem:[#allocation2 + $0xf8] sm:$0xff]
  %831 = vrot.lane.b32.xlu0 %v829, 48
  %v832 = vpop.permute.xlu0 %831
  %834 = vst.msk [vmem:[#allocation3 + $0x28] sm:$0xff] %vm641, %v832
  %v835 = vld [vmem:[#allocation2 + $0x108] sm:$0xff]
  %837 = vrot.lane.b32.xlu0 %v835, 48
  %v838 = vpop.permute.xlu0 %837
  %840 = vst.msk [vmem:[#allocation3 + $0x38] sm:$0xff] %vm641, %v838
  %v841 = vld [vmem:[#allocation2 + $0xa8] sm:$0xff]
  %843 = vrot.lane.b32.xlu0 %v841, 64
  %v844 = vpop.permute.xlu0 %843
  %846 = vst.msk [vmem:[#allocation3 + $0x8] sm:$0xff] %vm666, %v844
  %v847 = vld [vmem:[#allocation2 + $0xb8] sm:$0xff]
  %849 = vrot.lane.b32.xlu0 %v847, 64
  %v850 = vpop.permute.xlu0 %849
  %852 = vst.msk [vmem:[#allocation3 + $0x18] sm:$0xff] %vm666, %v850
  %v853 = vld [vmem:[#allocation2 + $0x118] sm:$0xff]
  %855 = vrot.lane.b32.xlu0 %v853, 64
  %v856 = vpop.permute.xlu0 %855
  %858 = vst.msk [vmem:[#allocation3 + $0x28] sm:$0xff] %vm666, %v856
  %v859 = vld [vmem:[#allocation2 + $0x128] sm:$0xff]
  %861 = vrot.lane.b32.xlu0 %v859, 64
  %v862 = vpop.permute.xlu0 %861
  %864 = vst.msk [vmem:[#allocation3 + $0x38] sm:$0xff] %vm666, %v862
  %v865 = vld [vmem:[#allocation2 + $0xb0] sm:$0xff]
  %867 = vrot.lane.b32.xlu0 %v865, 80
  %v868 = vpop.permute.xlu0 %867
  %870 = vst.msk [vmem:[#allocation3 + $0x8] sm:$0xff] %vm691, %v868
  %v871 = vld [vmem:[#allocation2 + $0xc0] sm:$0xff]
  %873 = vrot.lane.b32.xlu0 %v871, 80
  %v874 = vpop.permute.xlu0 %873
  %876 = vst.msk [vmem:[#allocation3 + $0x18] sm:$0xff] %vm691, %v874
  %v877 = vld [vmem:[#allocation2 + $0x120] sm:$0xff]
  %879 = vrot.lane.b32.xlu0 %v877, 80
  %v880 = vpop.permute.xlu0 %879
  %882 = vst.msk [vmem:[#allocation3 + $0x28] sm:$0xff] %vm691, %v880
  %v883 = vld [vmem:[#allocation2 + $0x130] sm:$0xff]
  %885 = vrot.lane.b32.xlu0 %v883, 80
  %v886 = vpop.permute.xlu0 %885
  %888 = vst.msk [vmem:[#allocation3 + $0x38] sm:$0xff] %vm691, %v886
  %v889 = vld [vmem:[#allocation2 + $0xb8] sm:$0xff]
  %891 = vrot.lane.b32.xlu0 %v889, 96
  %v892 = vpop.permute.xlu0 %891
  %894 = vst.msk [vmem:[#allocation3 + $0x8] sm:$0xff] %vm716, %v892
  %v895 = vld [vmem:[#allocation2 + $0xc8] sm:$0xff]
  %897 = vrot.lane.b32.xlu0 %v895, 96
  %v898 = vpop.permute.xlu0 %897
  %900 = vst.msk [vmem:[#allocation3 + $0x18] sm:$0xff] %vm716, %v898
  %v901 = vld [vmem:[#allocation2 + $0x128] sm:$0xff]
  %903 = vrot.lane.b32.xlu0 %v901, 96
  %v904 = vpop.permute.xlu0 %903
  %906 = vst.msk [vmem:[#allocation3 + $0x28] sm:$0xff] %vm716, %v904
  %v907 = vld [vmem:[#allocation2 + $0x138] sm:$0xff]
  %909 = vrot.lane.b32.xlu0 %v907, 96
  %v910 = vpop.permute.xlu0 %909
  %912 = vst.msk [vmem:[#allocation3 + $0x38] sm:$0xff] %vm716, %v910
  %v913 = vld [vmem:[#allocation2 + $0xc0] sm:$0xff]
  %915 = vrot.lane.b32.xlu0 %v913, 112
  %v916 = vpop.permute.xlu0 %915
  %918 = vst.msk [vmem:[#allocation3 + $0x8] sm:$0xff] %vm741, %v916
  %v919 = vld [vmem:[#allocation2 + $0xd0] sm:$0xff]
  %921 = vrot.lane.b32.xlu0 %v919, 112
  %v922 = vpop.permute.xlu0 %921
  %924 = vst.msk [vmem:[#allocation3 + $0x18] sm:$0xff] %vm741, %v922
  %v925 = vld [vmem:[#allocation2 + $0x130] sm:$0xff]
  %927 = vrot.lane.b32.xlu0 %v925, 112
  %v928 = vpop.permute.xlu0 %927
  %930 = vst.msk [vmem:[#allocation3 + $0x28] sm:$0xff] %vm741, %v928
  %v931 = vld [vmem:[#allocation2 + $0x140] sm:$0xff]
  %933 = vrot.lane.b32.xlu0 %v931, 112
  %v934 = vpop.permute.xlu0 %933
  %936 = vst.msk [vmem:[#allocation3 + $0x38] sm:$0xff] %vm741, %v934
  %v937 = vld [vmem:[#allocation3] sm:$0xff]
  %v938 = vld [vmem:[#allocation3 + $0x8] sm:$0xff]
  %v939 = vld [vmem:[#allocation3 + $0x10] sm:$0xff]
  %v940 = vld [vmem:[#allocation3 + $0x18] sm:$0xff]
  %v941 = vld [vmem:[#allocation3 + $0x20] sm:$0xff]
  %v942 = vld [vmem:[#allocation3 + $0x28] sm:$0xff]
  %v943 = vld [vmem:[#allocation3 + $0x30] sm:$0xff]
  %v944 = vld [vmem:[#allocation3 + $0x38] sm:$0xff]
  %v945 = vld [vmem:[%s3] sm:$0xff]
  %v946 = vld [vmem:[%s3 + $0x8] sm:$0xff]
  %v947 = vld [vmem:[%s3 + $0x10] sm:$0xff]
  %v948 = vld [vmem:[%s3 + $0x18] sm:$0xff]
  %v949 = vld [vmem:[%s3 + $0x20] sm:$0xff]
  %v950 = vld [vmem:[%s3 + $0x28] sm:$0xff]
  %v951 = vld [vmem:[%s3 + $0x30] sm:$0xff]
  %v952 = vld [vmem:[%s3 + $0x38] sm:$0xff]
  %v953 = vld [vmem:[%s3 + $0x40] sm:$0xff]
  %v954 = vld [vmem:[%s3 + $0x48] sm:$0xff]
  %v955 = vld [vmem:[%s3 + $0x50] sm:$0xff]
  %v956 = vld [vmem:[%s3 + $0x58] sm:$0xff]
  %v957 = vld [vmem:[%s3 + $0x60] sm:$0xff]
  %v958 = vld [vmem:[%s3 + $0x68] sm:$0xff]
  %v959 = vld [vmem:[%s3 + $0x70] sm:$0xff]
  %v960 = vld [vmem:[%s3 + $0x78] sm:$0xff]
  %v961 = vld [vmem:[%s3 + $0x80] sm:$0xff]
  %v962 = vld [vmem:[%s3 + $0x88] sm:$0xff]
  %v963 = vld [vmem:[%s3 + $0x90] sm:$0xff]
  %v964 = vld [vmem:[%s3 + $0x98] sm:$0xff]
  %v965 = vld [vmem:[%s3 + $0xa0] sm:$0xff]
  %v966 = vld [vmem:[%s3 + $0xa8] sm:$0xff]
  %v967 = vld [vmem:[%s3 + $0xb0] sm:$0xff]
  %v968 = vld [vmem:[%s3 + $0xb8] sm:$0xff]
  %v969 = vld [vmem:[%s3 + $0xc0] sm:$0xff]
  %v970 = vld [vmem:[%s3 + $0xc8] sm:$0xff]
  %v971 = vld [vmem:[%s3 + $0xd0] sm:$0xff]
  %v972 = vld [vmem:[%s3 + $0xd8] sm:$0xff]
  %v973 = vld [vmem:[%s3 + $0xe0] sm:$0xff]
  %v974 = vld [vmem:[%s3 + $0xe8] sm:$0xff]
  %v975 = vld [vmem:[%s3 + $0xf0] sm:$0xff]
  %v976 = vld [vmem:[%s3 + $0xf8] sm:$0xff]
  %v977 = vld [vmem:[%s4] sm:$0x1]
  %v979 = vlaneseq
  %v980 = vshrl.u32 %v979, 7
  %v981 = vsub.s32 0, %v980
  %v982 = vrot.slane %v977, %v981
  %984 = vmatprep.subr.mxu0 0.0
  %985 = vmatpush1.msra.mxu0 %v960
  %986 = vmatprep.subr.mxu0 0.0
  %987 = vmatpush1.msra.mxu0 %v959
  %988 = vmatprep.subr.mxu0 0.0
  %989 = vmatpush1.msra.mxu0 %v958
  %990 = vmatprep.subr.mxu0 0.0
  %991 = vmatpush1.msra.mxu0 %v957
  %992 = vmatprep.subr.mxu0 0.0
  %993 = vmatpush1.msra.mxu0 %v956
  %994 = vmatprep.subr.mxu0 0.0
  %995 = vmatpush1.msra.mxu0 %v955
  %996 = vmatprep.subr.mxu0 0.0
  %997 = vmatpush1.msra.mxu0 %v954
  %998 = vmatprep.subr.mxu0 0.0
  %999 = vmatpush1.msra.mxu0 %v953
  %1000 = vmatprep.subr.mxu0 0.0
  %1001 = vmatpush1.msra.mxu0 %v952
  %1002 = vmatprep.subr.mxu0 0.0
  %1003 = vmatpush1.msra.mxu0 %v951
  %1004 = vmatprep.subr.mxu0 0.0
  %1005 = vmatpush1.msra.mxu0 %v950
  %1006 = vmatprep.subr.mxu0 0.0
  %1007 = vmatpush1.msra.mxu0 %v949
  %1008 = vmatprep.subr.mxu0 0.0
  %1009 = vmatpush1.msra.mxu0 %v948
  %1010 = vmatprep.subr.mxu0 0.0
  %1011 = vmatpush1.msra.mxu0 %v947
  %1012 = vmatprep.subr.mxu0 0.0
  %1013 = vmatpush1.msra.mxu0 %v946
  %1014 = vmatprep.subr.mxu0 0.0
  %1015 = vmatpush1.msra.mxu0 %v945
  %1016 = vmatprep.subr.mxu0 0.0
  %1017 = vmatpush2.msra.mxu0 %v976
  %1018 = vmatprep.subr.mxu0 0.0
  %1019 = vmatpush2.msra.mxu0 %v975
  %1020 = vmatprep.subr.mxu0 0.0
  %1021 = vmatpush2.msra.mxu0 %v974
  %1022 = vmatprep.subr.mxu0 0.0
  %1023 = vmatpush2.msra.mxu0 %v973
  %1024 = vmatprep.subr.mxu0 0.0
  %1025 = vmatpush2.msra.mxu0 %v972
  %1026 = vmatprep.subr.mxu0 0.0
  %1027 = vmatpush2.msra.mxu0 %v971
  %1028 = vmatprep.subr.mxu0 0.0
  %1029 = vmatpush2.msra.mxu0 %v970
  %1030 = vmatprep.subr.mxu0 0.0
  %1031 = vmatpush2.msra.mxu0 %v969
  %1032 = vmatprep.subr.mxu0 0.0
  %1033 = vmatpush2.msra.mxu0 %v968
  %1034 = vmatprep.subr.mxu0 0.0
  %1035 = vmatpush2.msra.mxu0 %v967
  %1036 = vmatprep.subr.mxu0 0.0
  %1037 = vmatpush2.msra.mxu0 %v966
  %1038 = vmatprep.subr.mxu0 0.0
  %1039 = vmatpush2.msra.mxu0 %v965
  %1040 = vmatprep.subr.mxu0 0.0
  %1041 = vmatpush2.msra.mxu0 %v964
  %1042 = vmatprep.subr.mxu0 0.0
  %1043 = vmatpush2.msra.mxu0 %v963
  %1044 = vmatprep.subr.mxu0 0.0
  %1045 = vmatpush2.msra.mxu0 %v962
  %1046 = vmatprep.subr.mxu0 0.0
  %1047 = vmatpush2.msra.mxu0 %v961
  %1048 = vmatprep.mubr.f32.mxu0 %v938
  %1049 = vmatmul.mubr.f32.gmra.mxu0 %v937
  %v1050 = vpop.f32.mrf.mxu0
  %v1051 = vadd.f32 %v982, %v1050
  %v1052 = vpop.f32.mrf.mxu0
  %1053 = vmatprep.mubr.f32.mxu0 %v940
  %1054 = vmatmul.mubr.f32.gmra.mxu0 %v939
  %v1055 = vpop.f32.mrf.mxu0
  %v1056 = vadd.f32 %v982, %v1055
  %v1057 = vpop.f32.mrf.mxu0
  %1058 = vmatprep.mubr.f32.mxu0 %v942
  %1059 = vmatmul.mubr.f32.gmra.mxu0 %v941
  %v1060 = vpop.f32.mrf.mxu0
  %v1061 = vadd.f32 %v982, %v1060
  %v1062 = vpop.f32.mrf.mxu0
  %1063 = vmatprep.mubr.f32.mxu0 %v944
  %1064 = vmatmul.mubr.f32.gmra.mxu0 %v943
  %v1065 = vpop.f32.mrf.mxu0
  %v1066 = vadd.f32 %v982, %v1065
  %v1067 = vpop.f32.mrf.mxu0
  %1068 = vdwg.mxu0
  %v1069 = vmax.f32 %v1051, 0.0
  %v1070 = vmax.f32 %v1056, 0.0
  %v1071 = vmax.f32 %v1061, 0.0
  %v1072 = vmax.f32 %v1066, 0.0
  %vm1073 = vcmask 261120
  %1074 = vst.msk [vmem:[#allocation4] sm:$0xff] %vm1073, %v1069
  %1075 = vst.msk [vmem:[#allocation4 + $0x8] sm:$0xff] %vm1073, %v1070
  %1076 = vst.msk [vmem:[#allocation4 + $0x10] sm:$0xff] %vm1073, %v1071
  %1077 = vst.msk [vmem:[#allocation4 + $0x18] sm:$0xff] %vm1073, %v1072
  %v1078 = vld [vmem:[#allocation4] sm:$0xff]
  %1079 = vst.msk [vmem:[#allocation5] sm:$0xff] %vm1073, %v1078
  %v1080 = vld [vmem:[#allocation4 + $0x8] sm:$0xff]
  %1082 = vrot.lane.b32.xlu0 %v1080, 32
  %v1083 = vpop.permute.xlu0 %1082
  %vm1085 = vcmask 523520
  %1086 = vst.msk [vmem:[#allocation5] sm:$0xff] %vm1085, %v1083
  %v1087 = vld [vmem:[#allocation4 + $0x10] sm:$0xff]
  %1089 = vrot.lane.b32.xlu0 %v1087, 64
  %v1090 = vpop.permute.xlu0 %1089
  %vm1092 = vcmask 785920
  %1093 = vst.msk [vmem:[#allocation5] sm:$0xff] %vm1092, %v1090
  %v1094 = vld [vmem:[#allocation4 + $0x18] sm:$0xff]
  %1096 = vrot.lane.b32.xlu0 %v1094, 96
  %v1097 = vpop.permute.xlu0 %1096
  %vm1099 = vcmask 1048320
  %1100 = vst.msk [vmem:[#allocation5] sm:$0xff] %vm1099, %v1097
  %v1101 = vld [vmem:[#allocation5] sm:$0xff]
  %v1102 = vld [vmem:[%s5] sm:$0xff]
  %v1103 = vld [vmem:[%s5 + $0x8] sm:$0xff]
  %v1104 = vld [vmem:[%s5 + $0x10] sm:$0xff]
  %v1105 = vld [vmem:[%s5 + $0x18] sm:$0xff]
  %v1106 = vld [vmem:[%s5 + $0x20] sm:$0xff]
  %v1107 = vld [vmem:[%s5 + $0x28] sm:$0xff]
  %v1108 = vld [vmem:[%s5 + $0x30] sm:$0xff]
  %v1109 = vld [vmem:[%s5 + $0x38] sm:$0xff]
  %v1110 = vld [vmem:[%s5 + $0x40] sm:$0xff]
  %v1111 = vld [vmem:[%s5 + $0x48] sm:$0xff]
  %v1112 = vld [vmem:[%s5 + $0x50] sm:$0xff]
  %v1113 = vld [vmem:[%s5 + $0x58] sm:$0xff]
  %v1114 = vld [vmem:[%s5 + $0x60] sm:$0xff]
  %v1115 = vld [vmem:[%s5 + $0x68] sm:$0xff]
  %v1116 = vld [vmem:[%s5 + $0x70] sm:$0xff]
  %v1117 = vld [vmem:[%s5 + $0x78] sm:$0xff]
  %v1118 = vld [vmem:[%s5 + $0x80] sm:$0xff]
  %v1119 = vld [vmem:[%s5 + $0x88] sm:$0xff]
  %v1120 = vld [vmem:[%s5 + $0x90] sm:$0xff]
  %v1121 = vld [vmem:[%s5 + $0x98] sm:$0xff]
  %v1122 = vld [vmem:[%s5 + $0xa0] sm:$0xff]
  %v1123 = vld [vmem:[%s5 + $0xa8] sm:$0xff]
  %v1124 = vld [vmem:[%s5 + $0xb0] sm:$0xff]
  %v1125 = vld [vmem:[%s5 + $0xb8] sm:$0xff]
  %v1126 = vld [vmem:[%s5 + $0xc0] sm:$0xff]
  %v1127 = vld [vmem:[%s5 + $0xc8] sm:$0xff]
  %v1128 = vld [vmem:[%s5 + $0xd0] sm:$0xff]
  %v1129 = vld [vmem:[%s5 + $0xd8] sm:$0xff]
  %v1130 = vld [vmem:[%s5 + $0xe0] sm:$0xff]
  %v1131 = vld [vmem:[%s5 + $0xe8] sm:$0xff]
  %v1132 = vld [vmem:[%s5 + $0xf0] sm:$0xff]
  %v1133 = vld [vmem:[%s5 + $0xf8] sm:$0xff]
  %v1134 = vld [vmem:[%s6] sm:$0x3]
  %v1136 = vlaneseq
  %v1137 = vshrl.u32 %v1136, 7
  %v1138 = vsub.s32 0, %v1137
  %v1139 = vrot.slane %v1134, %v1138
  %v1140 = vlaneseq
  %v1141 = vshrl.u32 %v1140, 7
  %v1142 = vsub.s32 1, %v1141
  %v1143 = vrot.slane %v1134, %v1142
  %1146 = vmatprep.subr.mxu0 %v1133
  %1147 = vmatpush1.msra.mxu0 %v1132
  %1148 = vmatprep.subr.mxu0 %v1131
  %1149 = vmatpush1.msra.mxu0 %v1130
  %1150 = vmatprep.subr.mxu0 %v1129
  %1151 = vmatpush1.msra.mxu0 %v1128
  %1152 = vmatprep.subr.mxu0 %v1127
  %1153 = vmatpush1.msra.mxu0 %v1126
  %1154 = vmatprep.subr.mxu0 %v1125
  %1155 = vmatpush1.msra.mxu0 %v1124
  %1156 = vmatprep.subr.mxu0 %v1123
  %1157 = vmatpush1.msra.mxu0 %v1122
  %1158 = vmatprep.subr.mxu0 %v1121
  %1159 = vmatpush1.msra.mxu0 %v1120
  %1160 = vmatprep.subr.mxu0 %v1119
  %1161 = vmatpush1.msra.mxu0 %v1118
  %1162 = vmatprep.subr.mxu0 %v1117
  %1163 = vmatpush1.msra.mxu0 %v1116
  %1164 = vmatprep.subr.mxu0 %v1115
  %1165 = vmatpush1.msra.mxu0 %v1114
  %1166 = vmatprep.subr.mxu0 %v1113
  %1167 = vmatpush1.msra.mxu0 %v1112
  %1168 = vmatprep.subr.mxu0 %v1111
  %1169 = vmatpush1.msra.mxu0 %v1110
  %1170 = vmatprep.subr.mxu0 %v1109
  %1171 = vmatpush1.msra.mxu0 %v1108
  %1172 = vmatprep.subr.mxu0 %v1107
  %1173 = vmatpush1.msra.mxu0 %v1106
  %1174 = vmatprep.subr.mxu0 %v1105
  %1175 = vmatpush1.msra.mxu0 %v1104
  %1176 = vmatprep.subr.mxu0 %v1103
  %1177 = vmatpush1.msra.mxu0 %v1102
  %1178 = vmatprep.subr.mxu0 0.0
  %1179 = vmatpush2.msra.mxu0 0.0
  %1180 = vmatprep.subr.mxu0 0.0
  %1181 = vmatpush2.msra.mxu0 0.0
  %1182 = vmatprep.subr.mxu0 0.0
  %1183 = vmatpush2.msra.mxu0 0.0
  %1184 = vmatprep.subr.mxu0 0.0
  %1185 = vmatpush2.msra.mxu0 0.0
  %1186 = vmatprep.subr.mxu0 0.0
  %1187 = vmatpush2.msra.mxu0 0.0
  %1188 = vmatprep.subr.mxu0 0.0
  %1189 = vmatpush2.msra.mxu0 0.0
  %1190 = vmatprep.subr.mxu0 0.0
  %1191 = vmatpush2.msra.mxu0 0.0
  %1192 = vmatprep.subr.mxu0 0.0
  %1193 = vmatpush2.msra.mxu0 0.0
  %1194 = vmatprep.subr.mxu0 0.0
  %1195 = vmatpush2.msra.mxu0 0.0
  %1196 = vmatprep.subr.mxu0 0.0
  %1197 = vmatpush2.msra.mxu0 0.0
  %1198 = vmatprep.subr.mxu0 0.0
  %1199 = vmatpush2.msra.mxu0 0.0
  %1200 = vmatprep.subr.mxu0 0.0
  %1201 = vmatpush2.msra.mxu0 0.0
  %1202 = vmatprep.subr.mxu0 0.0
  %1203 = vmatpush2.msra.mxu0 0.0
  %1204 = vmatprep.subr.mxu0 0.0
  %1205 = vmatpush2.msra.mxu0 0.0
  %1206 = vmatprep.subr.mxu0 0.0
  %1207 = vmatpush2.msra.mxu0 0.0
  %1208 = vmatprep.subr.mxu0 0.0
  %1209 = vmatpush2.msra.mxu0 0.0
  %1210 = vmatprep.mubr.f32.mxu0 0.0
  %1211 = vmatmul.mubr.f32.gmra.mxu0 %v1101
  %v1212 = vpop.f32.mrf.mxu0
  %v1213 = vadd.f32 %v1139, %v1212
  %v1214 = vpop.f32.mrf.mxu0
  %v1215 = vadd.f32 %v1143, %v1214
  %1216 = vdwg.mxu0
  %v1217 = vmax.f32 %v1213, 0.0
  %v1218 = vmax.f32 %v1215, 0.0
  %v1219 = vld [vmem:[%s7] sm:$0xff]
  %v1220 = vld [vmem:[%s7 + $0x8] sm:$0xff]
  %v1221 = vld [vmem:[%s7 + $0x10] sm:$0xff]
  %v1222 = vld [vmem:[%s7 + $0x18] sm:$0xff]
  %v1223 = vld [vmem:[%s7 + $0x20] sm:$0xff]
  %v1224 = vld [vmem:[%s7 + $0x28] sm:$0xff]
  %v1225 = vld [vmem:[%s7 + $0x30] sm:$0xff]
  %v1226 = vld [vmem:[%s7 + $0x38] sm:$0xff]
  %v1227 = vld [vmem:[%s7 + $0x40] sm:$0xff]
  %v1228 = vld [vmem:[%s7 + $0x48] sm:$0xff]
  %v1229 = vld [vmem:[%s7 + $0x50] sm:$0xff]
  %v1230 = vld [vmem:[%s7 + $0x58] sm:$0xff]
  %v1231 = vld [vmem:[%s7 + $0x60] sm:$0xff]
  %v1232 = vld [vmem:[%s7 + $0x68] sm:$0xff]
  %v1233 = vld [vmem:[%s7 + $0x70] sm:$0xff]
  %v1234 = vld [vmem:[%s7 + $0x78] sm:$0xff]
  %v1235 = vld [vmem:[%s7 + $0x80] sm:$0xff]
  %v1236 = vld [vmem:[%s7 + $0x88] sm:$0xff]
  %v1237 = vld [vmem:[%s7 + $0x90] sm:$0xff]
  %v1238 = vld [vmem:[%s7 + $0x98] sm:$0xff]
  %v1239 = vld [vmem:[%s7 + $0xa0] sm:$0xff]
  %v1240 = vld [vmem:[%s7 + $0xa8] sm:$0xff]
  %v1241 = vld [vmem:[%s7 + $0xb0] sm:$0xff]
  %v1242 = vld [vmem:[%s7 + $0xb8] sm:$0xff]
  %v1243 = vld [vmem:[%s7 + $0xc0] sm:$0xff]
  %v1244 = vld [vmem:[%s7 + $0xc8] sm:$0xff]
  %v1245 = vld [vmem:[%s7 + $0xd0] sm:$0xff]
  %v1246 = vld [vmem:[%s7 + $0xd8] sm:$0xff]
  %v1247 = vld [vmem:[%s7 + $0xe0] sm:$0xff]
  %v1248 = vld [vmem:[%s7 + $0xe8] sm:$0xff]
  %v1249 = vld [vmem:[%s7 + $0xf0] sm:$0xff]
  %v1250 = vld [vmem:[%s7 + $0xf8] sm:$0xff]
  %v1251 = vld [vmem:[%s8] sm:$0x1]
  %v1253 = vlaneseq
  %v1254 = vshrl.u32 %v1253, 7
  %v1255 = vsub.s32 0, %v1254
  %v1256 = vrot.slane %v1251, %v1255
  %1258 = vmatprep.subr.mxu0 0.0
  %1259 = vmatpush1.msra.mxu0 %v1234
  %1260 = vmatprep.subr.mxu0 0.0
  %1261 = vmatpush1.msra.mxu0 %v1233
  %1262 = vmatprep.subr.mxu0 0.0
  %1263 = vmatpush1.msra.mxu0 %v1232
  %1264 = vmatprep.subr.mxu0 0.0
  %1265 = vmatpush1.msra.mxu0 %v1231
  %1266 = vmatprep.subr.mxu0 0.0
  %1267 = vmatpush1.msra.mxu0 %v1230
  %1268 = vmatprep.subr.mxu0 0.0
  %1269 = vmatpush1.msra.mxu0 %v1229
  %1270 = vmatprep.subr.mxu0 0.0
  %1271 = vmatpush1.msra.mxu0 %v1228
  %1272 = vmatprep.subr.mxu0 0.0
  %1273 = vmatpush1.msra.mxu0 %v1227
  %1274 = vmatprep.subr.mxu0 0.0
  %1275 = vmatpush1.msra.mxu0 %v1226
  %1276 = vmatprep.subr.mxu0 0.0
  %1277 = vmatpush1.msra.mxu0 %v1225
  %1278 = vmatprep.subr.mxu0 0.0
  %1279 = vmatpush1.msra.mxu0 %v1224
  %1280 = vmatprep.subr.mxu0 0.0
  %1281 = vmatpush1.msra.mxu0 %v1223
  %1282 = vmatprep.subr.mxu0 0.0
  %1283 = vmatpush1.msra.mxu0 %v1222
  %1284 = vmatprep.subr.mxu0 0.0
  %1285 = vmatpush1.msra.mxu0 %v1221
  %1286 = vmatprep.subr.mxu0 0.0
  %1287 = vmatpush1.msra.mxu0 %v1220
  %1288 = vmatprep.subr.mxu0 0.0
  %1289 = vmatpush1.msra.mxu0 %v1219
  %1290 = vmatprep.subr.mxu0 0.0
  %1291 = vmatpush2.msra.mxu0 %v1250
  %1292 = vmatprep.subr.mxu0 0.0
  %1293 = vmatpush2.msra.mxu0 %v1249
  %1294 = vmatprep.subr.mxu0 0.0
  %1295 = vmatpush2.msra.mxu0 %v1248
  %1296 = vmatprep.subr.mxu0 0.0
  %1297 = vmatpush2.msra.mxu0 %v1247
  %1298 = vmatprep.subr.mxu0 0.0
  %1299 = vmatpush2.msra.mxu0 %v1246
  %1300 = vmatprep.subr.mxu0 0.0
  %1301 = vmatpush2.msra.mxu0 %v1245
  %1302 = vmatprep.subr.mxu0 0.0
  %1303 = vmatpush2.msra.mxu0 %v1244
  %1304 = vmatprep.subr.mxu0 0.0
  %1305 = vmatpush2.msra.mxu0 %v1243
  %1306 = vmatprep.subr.mxu0 0.0
  %1307 = vmatpush2.msra.mxu0 %v1242
  %1308 = vmatprep.subr.mxu0 0.0
  %1309 = vmatpush2.msra.mxu0 %v1241
  %1310 = vmatprep.subr.mxu0 0.0
  %1311 = vmatpush2.msra.mxu0 %v1240
  %1312 = vmatprep.subr.mxu0 0.0
  %1313 = vmatpush2.msra.mxu0 %v1239
  %1314 = vmatprep.subr.mxu0 0.0
  %1315 = vmatpush2.msra.mxu0 %v1238
  %1316 = vmatprep.subr.mxu0 0.0
  %1317 = vmatpush2.msra.mxu0 %v1237
  %1318 = vmatprep.subr.mxu0 0.0
  %1319 = vmatpush2.msra.mxu0 %v1236
  %1320 = vmatprep.subr.mxu0 0.0
  %1321 = vmatpush2.msra.mxu0 %v1235
  %1322 = vmatprep.mubr.f32.mxu0 %v1218
  %1323 = vmatmul.mubr.f32.gmra.mxu0 %v1217
  %v1324 = vpop.f32.mrf.mxu0
  %v1325 = vadd.f32 %v1256, %v1324
  %v1326 = vpop.f32.mrf.mxu0
  %1327 = vdwg.mxu0
  %1328 = vst [vmem:[%s9] sm:$0xff] %v1325
  // Predicated region
  $region38: #{forward.1} parent=0 // pred_check
    _
  $region39: #{forward.1} parent=0 // pred_check_branch
    %1330 = sbr.rel (0) target = $region41
  $region40: #{forward.1} parent=0 // pred_region
    _
  $region41: #{forward.1} parent=0 // pred_fallthru
    _
  // Predicated region
  $region42: #{forward.1} parent=0 // pred_check
    _
  $region43: #{forward.1} parent=0 // pred_check_branch
    %1332 = sbr.rel (0) target = $region45
  $region44: #{forward.1} parent=0 // pred_region
    _
  $region45: #{forward.1} parent=0 // pred_fallthru
    _

</llo_original>
